<compile_context>
chip_gen: v5e
topology: v5e:2x2
jax: 0.10.0
libtpu: 0.0.40
codegen_flags: <defaults>
</compile_context>

<pallas_src>
import functools

import jax
import jax.numpy as jnp
from jax.experimental import pallas as pl


OUT_ROWS = 8      # output slab sublanes (row 0 = pred, row 1 = attention)
OUT_LANES = 128   # lane-dense output width (unmasked stores + full-tile DMA)


# ----------------------------------------------------------------------------
# In-kernel helpers.
# ----------------------------------------------------------------------------
def _norm_adj(src, dst, n, e):
    """Symmetric-normalized dense adjacency with self loops, built in-kernel.

    src, dst : (1, e) int32 edge endpoints (values >= n contribute nothing).
    Built with iota one-hot + two MXU matmuls (no scatter and no transpose):
        sym = onehot(src) @ onehot(dst)^T + onehot(dst) @ onehot(src)^T
        A   = (sym > 0) + I ;   A_hat = D^-1/2 A D^-1/2
    Duplicate edges collapse to 1, matching the previous host-side builder.
    """
    f32 = jnp.float32
    node_ids = jax.lax.broadcasted_iota(jnp.int32, (n, e), 0)            # (n, e)
    oh_src = jnp.where(node_ids == src, 1.0, 0.0).astype(f32)            # (n, e)
    oh_dst = jnp.where(node_ids == dst, 1.0, 0.0).astype(f32)            # (n, e)
    contract = (((1,), (1,)), ((), ()))
    sym = (jax.lax.dot_general(oh_src, oh_dst, contract, preferred_element_type=f32)
           + jax.lax.dot_general(oh_dst, oh_src, contract, preferred_element_type=f32))
    ri = jax.lax.broadcasted_iota(jnp.int32, (n, n), 0)
    ci = jax.lax.broadcasted_iota(jnp.int32, (n, n), 1)
    eye = jnp.where(ri == ci, 1.0, 0.0).astype(f32)
    a = jnp.where(sym > 0.0, 1.0, 0.0).astype(f32) + eye
    # A is symmetric -> row sums == column sums; compute both reductions
    # directly so no (n,1) -> (1,n) transpose is ever needed.
    inv_r = jax.lax.rsqrt(jnp.maximum(jnp.sum(a, axis=1, keepdims=True), 1e-6))
    inv_c = jax.lax.rsqrt(jnp.maximum(jnp.sum(a, axis=0, keepdims=True), 1e-6))
    return a * inv_r * inv_c


def _mil_flow(x_ref, ei_ref, w_ref, out_ref, *, n, d, e, h):
    """One MIL/GCN flow: proj -> GCN(base) -> GCN(diff) -> gated attn -> head."""
    f32 = jnp.float32

    # ---- static, (8,128)-tile-aligned slices into the packed weight slab ----
    w1 = w_ref[0:d, :]                              # (d, h)
    wg1 = w_ref[d:d + h, :]                         # (h, h)
    wg2 = w_ref[d + h:d + 2 * h, :]                 # (h, h)
    v = w_ref[d + 2 * h:d + 3 * h, :]               # (h, h)  cols >= att_dim are 0
    wc = w_ref[d + 3 * h:d + 4 * h, :]              # (h, h)  cols >= n_classes are 0
    b1 = w_ref[d + 4 * h:d + 4 * h + 1, :]          # (1, h)
    wa_t = w_ref[d + 4 * h + 8:d + 4 * h + 9, :]    # (1, h)  attention vector (row)
    bc = w_ref[d + 4 * h + 16:d + 4 * h + 17, :]    # (1, h)

    # ---- adjacency matrices built in-kernel from the raw edge lists ----------
    adj = _norm_adj(ei_ref[0:1, :], ei_ref[1:2, :], n, e)
    adj_d = _norm_adj(ei_ref[2:3, :], ei_ref[3:4, :], n, e)

    # ---- instance projection + two GCN layers (f32: launch-bound at n=8) -----
    x = x_ref[...]
    hfeat = jnp.maximum(jnp.dot(x, w1, preferred_element_type=f32) + b1, 0.0)
    hfeat = jnp.maximum(
        jnp.dot(adj, jnp.dot(hfeat, wg1, preferred_element_type=f32),
                preferred_element_type=f32), 0.0)
    hfeat = jnp.maximum(
        jnp.dot(adj_d, jnp.dot(hfeat, wg2, preferred_element_type=f32),
                preferred_element_type=f32), 0.0)

    # ---- gated-tanh attention, lane-dense: scores live as a (1, n) row -------
    u = jnp.tanh(jnp.dot(hfeat, v, preferred_element_type=f32))          # (n, h)
    s = jax.lax.dot_general(wa_t, u, (((1,), (1,)), ((), ())),
                            preferred_element_type=f32)                  # (1, n)
    s = s - jnp.max(s, axis=-1, keepdims=True)
    p = jnp.exp(s)
    att = p / jnp.sum(p, axis=-1, keepdims=True)   # exact divide (reference parity)

    # ---- attention-weighted bag embedding (MXU) + classifier head ------------
    bag = jnp.dot(att, hfeat, preferred_element_type=f32)                # (1, h)
    pred = jnp.dot(bag, wc, preferred_element_type=f32) + bc             # (1, h)

    # ---- lane-dense output slab: zero fill + two row writes ------------------
    out_ref[...] = jnp.zeros_like(out_ref)
    out_ref[0:1, 0:h] = pred
    out_ref[1:2, 0:n] = att


def fused_mil_kernel(x0_ref, ei0_ref, w0_ref, x1_ref, ei1_ref, w1_ref,
                     out0_ref, out1_ref, *, n0, d0, e0, n1, d1, e1, h):
    # Both flows in one invocation (unrolled; each at its native static shape).
    _mil_flow(x0_ref, ei0_ref, w0_ref, out0_ref, n=n0, d=d0, e=e0, h=h)
    _mil_flow(x1_ref, ei1_ref, w1_ref, out1_ref, n=n1, d=d1, e=e1, h=h)


def fused_mil_forward(x0, ei0, w0, x1, ei1, w1, *, hidden):
    n0, d0 = x0.shape
    n1, d1 = x1.shape
    e0, e1 = ei0.shape[1], ei1.shape[1]
    kern = functools.partial(fused_mil_kernel, n0=n0, d0=d0, e0=e0,
                             n1=n1, d1=d1, e1=e1, h=hidden)
    # Gridless single invocation: all inputs land in VMEM exactly once
    # (< 250 KB total), no pipelining / blocking machinery needed.
    return pl.pallas_call(
        kern,
        out_shape=(jax.ShapeDtypeStruct((OUT_ROWS, OUT_LANES), jnp.float32),
                   jax.ShapeDtypeStruct((OUT_ROWS, OUT_LANES), jnp.float32)),
    )(x0, ei0, w0, x1, ei1, w1)


# ----------------------------------------------------------------------------
# Parameter init / packing.
# ----------------------------------------------------------------------------
def init_flow_params(key, d_in, hidden, att_dim, n_classes):
    ks = jax.random.split(key, 7)
    sc = lambda fan_in: 1.0 / jnp.sqrt(jnp.float32(fan_in))
    return {
        "w1":  jax.random.normal(ks[0], (d_in, hidden), jnp.float32) * sc(d_in),
        "b1":  jnp.zeros((1, hidden), jnp.float32),
        "wg1": jax.random.normal(ks[1], (hidden, hidden), jnp.float32) * sc(hidden),
        "wg2": jax.random.normal(ks[2], (hidden, hidden), jnp.float32) * sc(hidden),
        "v":   jax.random.normal(ks[3], (hidden, att_dim), jnp.float32) * sc(hidden),
        "wa":  jax.random.normal(ks[4], (att_dim, 1), jnp.float32) * sc(att_dim),
        "wc":  jax.random.normal(ks[5], (hidden, n_classes), jnp.float32) * sc(hidden),
        "bc":  jnp.zeros((1, n_classes), jnp.float32),
    }


def pack_flow_params(p, hidden, att_dim, n_classes):
    """Pack one flow's params into a single (d + 4*hidden + 24, hidden) slab.

    Every sub-matrix starts at a row offset that is a multiple of 8 (asserted
    by the caller via d % 8 == 0, hidden % 8 == 0), so the in-kernel static
    slices stay (8,128)-tile aligned.
    """
    h = hidden
    v = jnp.pad(p["v"], ((0, 0), (0, h - att_dim)))
    wc = jnp.pad(p["wc"], ((0, 0), (0, h - n_classes)))
    wa_t = jnp.pad(p["wa"].T, ((0, 0), (0, h - att_dim)))
    bc = jnp.pad(p["bc"], ((0, 0), (0, h - n_classes)))
    pad7 = jnp.zeros((7, h), jnp.float32)
    return jnp.concatenate(
        [p["w1"], p["wg1"], p["wg2"], v, wc,
         p["b1"], pad7, wa_t, pad7, bc, pad7], axis=0)


def _pack_edges(ei_a, ei_b, num_nodes):
    """Stack base & diff edge lists into one (4, E) int32 array.

    Unequal edge counts are padded with `num_nodes`, which matches no node id
    inside the kernel and therefore contributes nothing to the adjacency.
    """
    e = max(ei_a.shape[1], ei_b.shape[1])

    def pad(ei):
        return jnp.pad(ei.astype(jnp.int32), ((0, 0), (0, e - ei.shape[1])),
                       constant_values=num_nodes)

    return jnp.concatenate([pad(ei_a), pad(ei_b)], axis=0)


class PallasMIL:
    """Pallas equivalent of model.sur_PP_MGCN.MIL (both flows fused in one call)."""

    def __init__(self, key, d_in, d_in_cmp, hidden=32, att_dim=32, n_classes=2):
        assert hidden % 8 == 0 and d_in % 8 == 0 and d_in_cmp % 8 == 0, (
            "tile-aligned weight-slab slices require d and hidden % 8 == 0")
        assert att_dim <= hidden and n_classes <= hidden
        assert hidden <= OUT_LANES
        self.hidden, self.att_dim, self.n_classes = hidden, att_dim, n_classes
        k1, k2 = jax.random.split(key)
        self.p_basic = init_flow_params(k1, d_in, hidden, att_dim, n_classes)
        self.p_cmp = init_flow_params(k2, d_in_cmp, hidden, att_dim, n_classes)
        self.w_basic = pack_flow_params(self.p_basic, hidden, att_dim, n_classes)
        self.w_cmp = pack_flow_params(self.p_cmp, hidden, att_dim, n_classes)

    def __call__(self, x, edge_index, edge_index_diff, feats_size_list,
                 x_cmp, edge_index_cmp, edge_index_diff_cmp, feats_size_list_cmp,
                 mask_prob):
        # TODO(synk): feats_size_list / mask_prob accepted for API parity; the
        # reference forward passes mask_prob=0 to both flows, so no masking.
        del feats_size_list, feats_size_list_cmp, mask_prob

        n, n_cmp = x.shape[0], x_cmp.shape[0]
        assert n <= OUT_LANES and n_cmp <= OUT_LANES, (
            "lane-dense output packing assumes bag size <= 128; "
            "node-tile the GCN before scaling n")

        ei0 = _pack_edges(edge_index, edge_index_diff, n)
        ei1 = _pack_edges(edge_index_cmp, edge_index_diff_cmp, n_cmp)

        out0, out1 = fused_mil_forward(
            x.astype(jnp.float32), ei0, self.w_basic,
            x_cmp.astype(jnp.float32), ei1, self.w_cmp,
            hidden=self.hidden)

        c = self.n_classes
        pred = out0[0:1, :c]                      # (1, C)
        att = out0[1, :n].reshape(n, 1)           # (N, 1)
        pred_cmp = out1[0:1, :c]
        att_cmp = out1[1, :n_cmp].reshape(n_cmp, 1)
        return [pred], att, [pred_cmp], att_cmp


# ----------------------------------------------------------------------------
# Pure-JAX reference of one flow (for a correctness cross-check only).
# ----------------------------------------------------------------------------
def reference_flow(x, edge_index, edge_index_diff, p):
    f32 = jnp.float32
    hp = jax.lax.Precision.HIGHEST
    n = x.shape[0]

    def norm_adj(ei):
        oh_src = jax.nn.one_hot(ei[0], n, dtype=f32)
        oh_dst = jax.nn.one_hot(ei[1], n, dtype=f32)
        counts = jnp.dot(oh_src.T, oh_dst, precision=hp)
        sym = counts + counts.T
        a = (sym > 0).astype(f32) + jnp.eye(n, dtype=f32)
        dis = jax.lax.rsqrt(jnp.maximum(jnp.sum(a, axis=1), 1e-6))
        return a * dis[:, None] * dis[None, :]

    adj, adj_d = norm_adj(edge_index), norm_adj(edge_index_diff)
    hfeat = jax.nn.relu(jnp.dot(x, p["w1"], precision=hp) + p["b1"])
    hfeat = jax.nn.relu(jnp.dot(adj, jnp.dot(hfeat, p["wg1"], precision=hp),
                                precision=hp))
    hfeat = jax.nn.relu(jnp.dot(adj_d, jnp.dot(hfeat, p["wg2"], precision=hp),
                                precision=hp))
    u = jnp.tanh(jnp.dot(hfeat, p["v"], precision=hp))
    s = jnp.dot(u, p["wa"], precision=hp).reshape(1, n)
    att = jax.nn.softmax(s, axis=-1)
    bag = jnp.dot(att, hfeat, precision=hp)
    pred = jnp.dot(bag, p["wc"], precision=hp) + p["bc"]
    return pred, att.reshape(n, 1)


# ----------------------------------------------------------------------------
if __name__ == "__main__":
    key = jax.random.PRNGKey(0)
    k_x, k_xc, k_e1, k_e2, k_e3, k_e4, k_model = jax.random.split(key, 7)

    N, D_IN = 8, 32          # basic flow: 8 instances, 32-d features
    N_CMP, D_IN_CMP = 8, 16  # contrastive flow: 8 instances, 16-d features
    E = 16

    x = jax.random.normal(k_x, (N, D_IN), jnp.float32)
    x_cmp = jax.random.normal(k_xc, (N_CMP, D_IN_CMP), jnp.float32)

    edge_index = jax.random.randint(k_e1, (2, E), 0, N)
    edge_index_diff = jax.random.randint(k_e2, (2, E), 0, N)
    edge_index_cmp = jax.random.randint(k_e3, (2, E), 0, N_CMP)
    edge_index_diff_cmp = jax.random.randint(k_e4, (2, E), 0, N_CMP)

    feats_size_list = [D_IN]
    feats_size_list_cmp = [D_IN_CMP]

    model = PallasMIL(k_model, D_IN, D_IN_CMP, hidden=32, att_dim=32, n_classes=2)

    predict_list, at_, predict_list_cmp, at_cmp = model(
        x, edge_index, edge_index_diff, feats_size_list,
        x_cmp, edge_index_cmp, edge_index_diff_cmp, feats_size_list_cmp,
        mask_prob=0)
    jax.block_until_ready((predict_list, at_, predict_list_cmp, at_cmp))

    # ---- shape checks ----------------------------------------------------------
    assert predict_list[0].shape == (1, 2)
    assert at_.shape == (N, 1)
    assert predict_list_cmp[0].shape == (1, 2)
    assert at_cmp.shape == (N_CMP, 1)

    # ---- numerics: exact softmax divide -> attention rows sum to 1 --------------
    assert jnp.abs(jnp.sum(at_) - 1.0) < 1e-4
    assert jnp.abs(jnp.sum(at_cmp) - 1.0) < 1e-4
    assert bool(jnp.all(jnp.isfinite(predict_list[0])))
    assert bool(jnp.all(jnp.isfinite(predict_list_cmp[0])))

    # ---- cross-check against the pure-JAX reference ------------------------------
    ref_pred, ref_att = reference_flow(x, edge_index, edge_index_diff,
                                       model.p_basic)
    ref_pred_c, ref_att_c = reference_flow(x_cmp, edge_index_cmp,
                                           edge_index_diff_cmp, model.p_cmp)
    assert jnp.allclose(predict_list[0], ref_pred, atol=1e-3, rtol=1e-3)
    assert jnp.allclose(at_, ref_att, atol=1e-3, rtol=1e-3)
    assert jnp.allclose(predict_list_cmp[0], ref_pred_c, atol=1e-3, rtol=1e-3)
    assert jnp.allclose(at_cmp, ref_att_c, atol=1e-3, rtol=1e-3)

    print("KERNEL_OK")
</pallas_src>

<mosaic_0001>
module attributes {stable_mosaic.version = 11 : i64} {
  func.func @fused_mil_kernel(%arg0: memref<8x32xf32, #tpu.memory_space<vmem>>, %arg1: memref<4x16xi32, #tpu.memory_space<vmem>>, %arg2: memref<184x32xf32, #tpu.memory_space<vmem>>, %arg3: memref<8x16xf32, #tpu.memory_space<vmem>>, %arg4: memref<4x16xi32, #tpu.memory_space<vmem>>, %arg5: memref<168x32xf32, #tpu.memory_space<vmem>>, %arg6: memref<8x128xf32, #tpu.memory_space<vmem>>, %arg7: memref<8x128xf32, #tpu.memory_space<vmem>>) attributes {dimension_semantics = [], scalar_prefetch = 0 : i64, scratch_operands = 0 : i64, tpu.core_type = #tpu.core_type<tc>} {
    %c0 = arith.constant 0 : index
    %c0_0 = arith.constant 0 : index
    %0 = vector.load %arg2[%c0, %c0_0] : memref<184x32xf32, #tpu.memory_space<vmem>>, vector<32x32xf32>
    %c32 = arith.constant 32 : index
    %c0_1 = arith.constant 0 : index
    %1 = vector.load %arg2[%c32, %c0_1] : memref<184x32xf32, #tpu.memory_space<vmem>>, vector<32x32xf32>
    %c64 = arith.constant 64 : index
    %c0_2 = arith.constant 0 : index
    %2 = vector.load %arg2[%c64, %c0_2] : memref<184x32xf32, #tpu.memory_space<vmem>>, vector<32x32xf32>
    %c96 = arith.constant 96 : index
    %c0_3 = arith.constant 0 : index
    %3 = vector.load %arg2[%c96, %c0_3] : memref<184x32xf32, #tpu.memory_space<vmem>>, vector<32x32xf32>
    %c128 = arith.constant 128 : index
    %c0_4 = arith.constant 0 : index
    %4 = vector.load %arg2[%c128, %c0_4] : memref<184x32xf32, #tpu.memory_space<vmem>>, vector<32x32xf32>
    %c160 = arith.constant 160 : index
    %c0_5 = arith.constant 0 : index
    %5 = vector.load %arg2[%c160, %c0_5] : memref<184x32xf32, #tpu.memory_space<vmem>>, vector<1x32xf32>
    %c168 = arith.constant 168 : index
    %c0_6 = arith.constant 0 : index
    %6 = vector.load %arg2[%c168, %c0_6] : memref<184x32xf32, #tpu.memory_space<vmem>>, vector<1x32xf32>
    %c176 = arith.constant 176 : index
    %c0_7 = arith.constant 0 : index
    %7 = vector.load %arg2[%c176, %c0_7] : memref<184x32xf32, #tpu.memory_space<vmem>>, vector<1x32xf32>
    %c0_8 = arith.constant 0 : index
    %c0_9 = arith.constant 0 : index
    %8 = vector.load %arg1[%c0_8, %c0_9] : memref<4x16xi32, #tpu.memory_space<vmem>>, vector<1x16xi32>
    %c1 = arith.constant 1 : index
    %c0_10 = arith.constant 0 : index
    %9 = vector.load %arg1[%c1, %c0_10] : memref<4x16xi32, #tpu.memory_space<vmem>>, vector<1x16xi32>
    %10 = tpu.iota {dimensions = array<i32: 0>} : vector<8x16xi32>
    %11 = vector.broadcast %8 : vector<1x16xi32> to vector<8x16xi32>
    %12 = arith.cmpi eq, %10, %11 : vector<8x16xi32>
    %cst = arith.constant 1.000000e+00 : f32
    %cst_11 = arith.constant 0.000000e+00 : f32
    %13 = vector.broadcast %cst : f32 to vector<8x16xf32>
    %14 = vector.broadcast %cst_11 : f32 to vector<8x16xf32>
    %15 = arith.select %12, %13, %14 : vector<8x16xi1>, vector<8x16xf32>
    %16 = vector.broadcast %9 : vector<1x16xi32> to vector<8x16xi32>
    %17 = arith.cmpi eq, %10, %16 : vector<8x16xi32>
    %cst_12 = arith.constant 1.000000e+00 : f32
    %cst_13 = arith.constant 0.000000e+00 : f32
    %18 = vector.broadcast %cst_12 : f32 to vector<8x16xf32>
    %19 = vector.broadcast %cst_13 : f32 to vector<8x16xf32>
    %20 = arith.select %17, %18, %19 : vector<8x16xi1>, vector<8x16xf32>
    %cst_14 = arith.constant dense<0.000000e+00> : vector<8x8xf32>
    %21 = tpu.matmul %15, %20, %cst_14 {dimension_numbers = #tpu.dot_dimension_numbers<[1], [1], [0], [0], [0, 0, 1, 0], [], []>} : vector<8x16xf32>, vector<8x16xf32>, vector<8x8xf32> -> vector<8x8xf32>
    %cst_15 = arith.constant dense<0.000000e+00> : vector<8x8xf32>
    %22 = tpu.matmul %20, %15, %cst_15 {dimension_numbers = #tpu.dot_dimension_numbers<[1], [1], [0], [0], [0, 0, 1, 0], [], []>} : vector<8x16xf32>, vector<8x16xf32>, vector<8x8xf32> -> vector<8x8xf32>
    %23 = arith.addf %21, %22 : vector<8x8xf32>
    %24 = tpu.iota {dimensions = array<i32: 0>} : vector<8x8xi32>
    %25 = tpu.iota {dimensions = array<i32: 1>} : vector<8x8xi32>
    %26 = arith.cmpi eq, %24, %25 : vector<8x8xi32>
    %cst_16 = arith.constant 1.000000e+00 : f32
    %cst_17 = arith.constant 0.000000e+00 : f32
    %27 = vector.broadcast %cst_16 : f32 to vector<8x8xf32>
    %28 = vector.broadcast %cst_17 : f32 to vector<8x8xf32>
    %29 = arith.select %26, %27, %28 : vector<8x8xi1>, vector<8x8xf32>
    %cst_18 = arith.constant 0.000000e+00 : f32
    %30 = vector.broadcast %cst_18 : f32 to vector<8x8xf32>
    %31 = arith.cmpf ogt, %23, %30 : vector<8x8xf32>
    %cst_19 = arith.constant 1.000000e+00 : f32
    %cst_20 = arith.constant 0.000000e+00 : f32
    %32 = vector.broadcast %cst_19 : f32 to vector<8x8xf32>
    %33 = vector.broadcast %cst_20 : f32 to vector<8x8xf32>
    %34 = arith.select %31, %32, %33 : vector<8x8xi1>, vector<8x8xf32>
    %35 = arith.addf %34, %29 : vector<8x8xf32>
    %cst_21 = arith.constant dense<0.000000e+00> : vector<8xf32>
    %36 = vector.multi_reduction <add>, %35, %cst_21 [1] : vector<8x8xf32> to vector<8xf32>
    %37 = vector.shape_cast %36 : vector<8xf32> to vector<8x1xf32>
    %cst_22 = arith.constant 9.99999997E-7 : f32
    %38 = vector.broadcast %cst_22 : f32 to vector<8x1xf32>
    %39 = arith.maximumf %37, %38 : vector<8x1xf32>
    %40 = math.rsqrt %39 : vector<8x1xf32>
    %cst_23 = arith.constant dense<0.000000e+00> : vector<8xf32>
    %41 = vector.multi_reduction <add>, %35, %cst_23 [0] : vector<8x8xf32> to vector<8xf32>
    %42 = vector.shape_cast %41 : vector<8xf32> to vector<1x8xf32>
    %cst_24 = arith.constant 9.99999997E-7 : f32
    %43 = vector.broadcast %cst_24 : f32 to vector<1x8xf32>
    %44 = arith.maximumf %42, %43 : vector<1x8xf32>
    %45 = math.rsqrt %44 : vector<1x8xf32>
    %46 = vector.broadcast %40 : vector<8x1xf32> to vector<8x8xf32>
    %47 = arith.mulf %35, %46 : vector<8x8xf32>
    %48 = vector.broadcast %45 : vector<1x8xf32> to vector<8x8xf32>
    %49 = arith.mulf %47, %48 : vector<8x8xf32>
    %c2 = arith.constant 2 : index
    %c0_25 = arith.constant 0 : index
    %50 = vector.load %arg1[%c2, %c0_25] : memref<4x16xi32, #tpu.memory_space<vmem>>, vector<1x16xi32>
    %c3 = arith.constant 3 : index
    %c0_26 = arith.constant 0 : index
    %51 = vector.load %arg1[%c3, %c0_26] : memref<4x16xi32, #tpu.memory_space<vmem>>, vector<1x16xi32>
    %52 = tpu.iota {dimensions = array<i32: 0>} : vector<8x16xi32>
    %53 = vector.broadcast %50 : vector<1x16xi32> to vector<8x16xi32>
    %54 = arith.cmpi eq, %52, %53 : vector<8x16xi32>
    %cst_27 = arith.constant 1.000000e+00 : f32
    %cst_28 = arith.constant 0.000000e+00 : f32
    %55 = vector.broadcast %cst_27 : f32 to vector<8x16xf32>
    %56 = vector.broadcast %cst_28 : f32 to vector<8x16xf32>
    %57 = arith.select %54, %55, %56 : vector<8x16xi1>, vector<8x16xf32>
    %58 = vector.broadcast %51 : vector<1x16xi32> to vector<8x16xi32>
    %59 = arith.cmpi eq, %52, %58 : vector<8x16xi32>
    %cst_29 = arith.constant 1.000000e+00 : f32
    %cst_30 = arith.constant 0.000000e+00 : f32
    %60 = vector.broadcast %cst_29 : f32 to vector<8x16xf32>
    %61 = vector.broadcast %cst_30 : f32 to vector<8x16xf32>
    %62 = arith.select %59, %60, %61 : vector<8x16xi1>, vector<8x16xf32>
    %cst_31 = arith.constant dense<0.000000e+00> : vector<8x8xf32>
    %63 = tpu.matmul %57, %62, %cst_31 {dimension_numbers = #tpu.dot_dimension_numbers<[1], [1], [0], [0], [0, 0, 1, 0], [], []>} : vector<8x16xf32>, vector<8x16xf32>, vector<8x8xf32> -> vector<8x8xf32>
    %cst_32 = arith.constant dense<0.000000e+00> : vector<8x8xf32>
    %64 = tpu.matmul %62, %57, %cst_32 {dimension_numbers = #tpu.dot_dimension_numbers<[1], [1], [0], [0], [0, 0, 1, 0], [], []>} : vector<8x16xf32>, vector<8x16xf32>, vector<8x8xf32> -> vector<8x8xf32>
    %65 = arith.addf %63, %64 : vector<8x8xf32>
    %66 = tpu.iota {dimensions = array<i32: 0>} : vector<8x8xi32>
    %67 = tpu.iota {dimensions = array<i32: 1>} : vector<8x8xi32>
    %68 = arith.cmpi eq, %66, %67 : vector<8x8xi32>
    %cst_33 = arith.constant 1.000000e+00 : f32
    %cst_34 = arith.constant 0.000000e+00 : f32
    %69 = vector.broadcast %cst_33 : f32 to vector<8x8xf32>
    %70 = vector.broadcast %cst_34 : f32 to vector<8x8xf32>
    %71 = arith.select %68, %69, %70 : vector<8x8xi1>, vector<8x8xf32>
    %cst_35 = arith.constant 0.000000e+00 : f32
    %72 = vector.broadcast %cst_35 : f32 to vector<8x8xf32>
    %73 = arith.cmpf ogt, %65, %72 : vector<8x8xf32>
    %cst_36 = arith.constant 1.000000e+00 : f32
    %cst_37 = arith.constant 0.000000e+00 : f32
    %74 = vector.broadcast %cst_36 : f32 to vector<8x8xf32>
    %75 = vector.broadcast %cst_37 : f32 to vector<8x8xf32>
    %76 = arith.select %73, %74, %75 : vector<8x8xi1>, vector<8x8xf32>
    %77 = arith.addf %76, %71 : vector<8x8xf32>
    %cst_38 = arith.constant dense<0.000000e+00> : vector<8xf32>
    %78 = vector.multi_reduction <add>, %77, %cst_38 [1] : vector<8x8xf32> to vector<8xf32>
    %79 = vector.shape_cast %78 : vector<8xf32> to vector<8x1xf32>
    %cst_39 = arith.constant 9.99999997E-7 : f32
    %80 = vector.broadcast %cst_39 : f32 to vector<8x1xf32>
    %81 = arith.maximumf %79, %80 : vector<8x1xf32>
    %82 = math.rsqrt %81 : vector<8x1xf32>
    %cst_40 = arith.constant dense<0.000000e+00> : vector<8xf32>
    %83 = vector.multi_reduction <add>, %77, %cst_40 [0] : vector<8x8xf32> to vector<8xf32>
    %84 = vector.shape_cast %83 : vector<8xf32> to vector<1x8xf32>
    %cst_41 = arith.constant 9.99999997E-7 : f32
    %85 = vector.broadcast %cst_41 : f32 to vector<1x8xf32>
    %86 = arith.maximumf %84, %85 : vector<1x8xf32>
    %87 = math.rsqrt %86 : vector<1x8xf32>
    %88 = vector.broadcast %82 : vector<8x1xf32> to vector<8x8xf32>
    %89 = arith.mulf %77, %88 : vector<8x8xf32>
    %90 = vector.broadcast %87 : vector<1x8xf32> to vector<8x8xf32>
    %91 = arith.mulf %89, %90 : vector<8x8xf32>
    %c0_42 = arith.constant 0 : index
    %c0_43 = arith.constant 0 : index
    %92 = vector.load %arg0[%c0_42, %c0_43] : memref<8x32xf32, #tpu.memory_space<vmem>>, vector<8x32xf32>
    %cst_44 = arith.constant dense<0.000000e+00> : vector<8x32xf32>
    %93 = tpu.matmul %92, %0, %cst_44 {dimension_numbers = #tpu.dot_dimension_numbers<[1], [0], [0], [1], [0, 0, 1, 1], [], []>} : vector<8x32xf32>, vector<32x32xf32>, vector<8x32xf32> -> vector<8x32xf32>
    %94 = vector.broadcast %5 : vector<1x32xf32> to vector<8x32xf32>
    %95 = arith.addf %93, %94 : vector<8x32xf32>
    %cst_45 = arith.constant 0.000000e+00 : f32
    %96 = vector.broadcast %cst_45 : f32 to vector<8x32xf32>
    %97 = arith.maximumf %95, %96 : vector<8x32xf32>
    %cst_46 = arith.constant dense<0.000000e+00> : vector<8x32xf32>
    %98 = tpu.matmul %97, %1, %cst_46 {dimension_numbers = #tpu.dot_dimension_numbers<[1], [0], [0], [1], [0, 0, 1, 1], [], []>} : vector<8x32xf32>, vector<32x32xf32>, vector<8x32xf32> -> vector<8x32xf32>
    %cst_47 = arith.constant dense<0.000000e+00> : vector<8x32xf32>
    %99 = tpu.matmul %49, %98, %cst_47 {dimension_numbers = #tpu.dot_dimension_numbers<[1], [0], [0], [1], [0, 0, 1, 1], [], []>} : vector<8x8xf32>, vector<8x32xf32>, vector<8x32xf32> -> vector<8x32xf32>
    %cst_48 = arith.constant 0.000000e+00 : f32
    %100 = vector.broadcast %cst_48 : f32 to vector<8x32xf32>
    %101 = arith.maximumf %99, %100 : vector<8x32xf32>
    %cst_49 = arith.constant dense<0.000000e+00> : vector<8x32xf32>
    %102 = tpu.matmul %101, %2, %cst_49 {dimension_numbers = #tpu.dot_dimension_numbers<[1], [0], [0], [1], [0, 0, 1, 1], [], []>} : vector<8x32xf32>, vector<32x32xf32>, vector<8x32xf32> -> vector<8x32xf32>
    %cst_50 = arith.constant dense<0.000000e+00> : vector<8x32xf32>
    %103 = tpu.matmul %91, %102, %cst_50 {dimension_numbers = #tpu.dot_dimension_numbers<[1], [0], [0], [1], [0, 0, 1, 1], [], []>} : vector<8x8xf32>, vector<8x32xf32>, vector<8x32xf32> -> vector<8x32xf32>
    %cst_51 = arith.constant 0.000000e+00 : f32
    %104 = vector.broadcast %cst_51 : f32 to vector<8x32xf32>
    %105 = arith.maximumf %103, %104 : vector<8x32xf32>
    %cst_52 = arith.constant dense<0.000000e+00> : vector<8x32xf32>
    %106 = tpu.matmul %105, %3, %cst_52 {dimension_numbers = #tpu.dot_dimension_numbers<[1], [0], [0], [1], [0, 0, 1, 1], [], []>} : vector<8x32xf32>, vector<32x32xf32>, vector<8x32xf32> -> vector<8x32xf32>
    %107 = math.tanh %106 : vector<8x32xf32>
    %cst_53 = arith.constant dense<0.000000e+00> : vector<1x8xf32>
    %108 = tpu.matmul %6, %107, %cst_53 {dimension_numbers = #tpu.dot_dimension_numbers<[1], [1], [0], [0], [0, 0, 1, 0], [], []>} : vector<1x32xf32>, vector<8x32xf32>, vector<1x8xf32> -> vector<1x8xf32>
    %cst_54 = arith.constant dense<0xFF800000> : vector<1xf32>
    %109 = vector.multi_reduction <maximumf>, %108, %cst_54 [1] : vector<1x8xf32> to vector<1xf32>
    %110 = vector.shape_cast %109 : vector<1xf32> to vector<1x1xf32>
    %111 = vector.broadcast %110 : vector<1x1xf32> to vector<1x8xf32>
    %112 = arith.subf %108, %111 : vector<1x8xf32>
    %113 = math.exp %112 : vector<1x8xf32>
    %cst_55 = arith.constant dense<0.000000e+00> : vector<1xf32>
    %114 = vector.multi_reduction <add>, %113, %cst_55 [1] : vector<1x8xf32> to vector<1xf32>
    %115 = vector.shape_cast %114 : vector<1xf32> to vector<1x1xf32>
    %116 = vector.broadcast %115 : vector<1x1xf32> to vector<1x8xf32>
    %117 = arith.divf %113, %116 : vector<1x8xf32>
    %cst_56 = arith.constant dense<0.000000e+00> : vector<1x32xf32>
    %118 = tpu.matmul %117, %105, %cst_56 {dimension_numbers = #tpu.dot_dimension_numbers<[1], [0], [0], [1], [0, 0, 1, 1], [], []>} : vector<1x8xf32>, vector<8x32xf32>, vector<1x32xf32> -> vector<1x32xf32>
    %cst_57 = arith.constant dense<0.000000e+00> : vector<1x32xf32>
    %119 = tpu.matmul %118, %4, %cst_57 {dimension_numbers = #tpu.dot_dimension_numbers<[1], [0], [0], [1], [0, 0, 1, 1], [], []>} : vector<1x32xf32>, vector<32x32xf32>, vector<1x32xf32> -> vector<1x32xf32>
    %120 = arith.addf %119, %7 : vector<1x32xf32>
    %cst_58 = arith.constant 0.000000e+00 : f32
    %121 = vector.broadcast %cst_58 : f32 to vector<8x128xf32>
    %c0_59 = arith.constant 0 : index
    %c0_60 = arith.constant 0 : index
    %122 = vector.load %arg6[%c0_59, %c0_60] : memref<8x128xf32, #tpu.memory_space<vmem>>, vector<8x128xf32>
    tpu.vector_store %arg6[%c0_59, %c0_60], %121 {strides = array<i32>} : memref<8x128xf32, #tpu.memory_space<vmem>>, vector<8x128xf32>,
    %c0_61 = arith.constant 0 : index
    %c0_62 = arith.constant 0 : index
    %123 = vector.load %arg6[%c0_61, %c0_62] : memref<8x128xf32, #tpu.memory_space<vmem>>, vector<1x32xf32>
    tpu.vector_store %arg6[%c0_61, %c0_62], %120 {strides = array<i32>} : memref<8x128xf32, #tpu.memory_space<vmem>>, vector<1x32xf32>,
    %c1_63 = arith.constant 1 : index
    %c0_64 = arith.constant 0 : index
    %124 = vector.load %arg6[%c1_63, %c0_64] : memref<8x128xf32, #tpu.memory_space<vmem>>, vector<1x8xf32>
    tpu.vector_store %arg6[%c1_63, %c0_64], %117 {strides = array<i32>} : memref<8x128xf32, #tpu.memory_space<vmem>>, vector<1x8xf32>,
    %c0_65 = arith.constant 0 : index
    %c0_66 = arith.constant 0 : index
    %125 = vector.load %arg5[%c0_65, %c0_66] : memref<168x32xf32, #tpu.memory_space<vmem>>, vector<16x32xf32>
    %c16 = arith.constant 16 : index
    %c0_67 = arith.constant 0 : index
    %126 = vector.load %arg5[%c16, %c0_67] : memref<168x32xf32, #tpu.memory_space<vmem>>, vector<32x32xf32>
    %c48 = arith.constant 48 : index
    %c0_68 = arith.constant 0 : index
    %127 = vector.load %arg5[%c48, %c0_68] : memref<168x32xf32, #tpu.memory_space<vmem>>, vector<32x32xf32>
    %c80 = arith.constant 80 : index
    %c0_69 = arith.constant 0 : index
    %128 = vector.load %arg5[%c80, %c0_69] : memref<168x32xf32, #tpu.memory_space<vmem>>, vector<32x32xf32>
    %c112 = arith.constant 112 : index
    %c0_70 = arith.constant 0 : index
    %129 = vector.load %arg5[%c112, %c0_70] : memref<168x32xf32, #tpu.memory_space<vmem>>, vector<32x32xf32>
    %c144 = arith.constant 144 : index
    %c0_71 = arith.constant 0 : index
    %130 = vector.load %arg5[%c144, %c0_71] : memref<168x32xf32, #tpu.memory_space<vmem>>, vector<1x32xf32>
    %c152 = arith.constant 152 : index
    %c0_72 = arith.constant 0 : index
    %131 = vector.load %arg5[%c152, %c0_72] : memref<168x32xf32, #tpu.memory_space<vmem>>, vector<1x32xf32>
    %c160_73 = arith.constant 160 : index
    %c0_74 = arith.constant 0 : index
    %132 = vector.load %arg5[%c160_73, %c0_74] : memref<168x32xf32, #tpu.memory_space<vmem>>, vector<1x32xf32>
    %c0_75 = arith.constant 0 : index
    %c0_76 = arith.constant 0 : index
    %133 = vector.load %arg4[%c0_75, %c0_76] : memref<4x16xi32, #tpu.memory_space<vmem>>, vector<1x16xi32>
    %c1_77 = arith.constant 1 : index
    %c0_78 = arith.constant 0 : index
    %134 = vector.load %arg4[%c1_77, %c0_78] : memref<4x16xi32, #tpu.memory_space<vmem>>, vector<1x16xi32>
    %135 = tpu.iota {dimensions = array<i32: 0>} : vector<8x16xi32>
    %136 = vector.broadcast %133 : vector<1x16xi32> to vector<8x16xi32>
    %137 = arith.cmpi eq, %135, %136 : vector<8x16xi32>
    %cst_79 = arith.constant 1.000000e+00 : f32
    %cst_80 = arith.constant 0.000000e+00 : f32
    %138 = vector.broadcast %cst_79 : f32 to vector<8x16xf32>
    %139 = vector.broadcast %cst_80 : f32 to vector<8x16xf32>
    %140 = arith.select %137, %138, %139 : vector<8x16xi1>, vector<8x16xf32>
    %141 = vector.broadcast %134 : vector<1x16xi32> to vector<8x16xi32>
    %142 = arith.cmpi eq, %135, %141 : vector<8x16xi32>
    %cst_81 = arith.constant 1.000000e+00 : f32
    %cst_82 = arith.constant 0.000000e+00 : f32
    %143 = vector.broadcast %cst_81 : f32 to vector<8x16xf32>
    %144 = vector.broadcast %cst_82 : f32 to vector<8x16xf32>
    %145 = arith.select %142, %143, %144 : vector<8x16xi1>, vector<8x16xf32>
    %cst_83 = arith.constant dense<0.000000e+00> : vector<8x8xf32>
    %146 = tpu.matmul %140, %145, %cst_83 {dimension_numbers = #tpu.dot_dimension_numbers<[1], [1], [0], [0], [0, 0, 1, 0], [], []>} : vector<8x16xf32>, vector<8x16xf32>, vector<8x8xf32> -> vector<8x8xf32>
    %cst_84 = arith.constant dense<0.000000e+00> : vector<8x8xf32>
    %147 = tpu.matmul %145, %140, %cst_84 {dimension_numbers = #tpu.dot_dimension_numbers<[1], [1], [0], [0], [0, 0, 1, 0], [], []>} : vector<8x16xf32>, vector<8x16xf32>, vector<8x8xf32> -> vector<8x8xf32>
    %148 = arith.addf %146, %147 : vector<8x8xf32>
    %149 = tpu.iota {dimensions = array<i32: 0>} : vector<8x8xi32>
    %150 = tpu.iota {dimensions = array<i32: 1>} : vector<8x8xi32>
    %151 = arith.cmpi eq, %149, %150 : vector<8x8xi32>
    %cst_85 = arith.constant 1.000000e+00 : f32
    %cst_86 = arith.constant 0.000000e+00 : f32
    %152 = vector.broadcast %cst_85 : f32 to vector<8x8xf32>
    %153 = vector.broadcast %cst_86 : f32 to vector<8x8xf32>
    %154 = arith.select %151, %152, %153 : vector<8x8xi1>, vector<8x8xf32>
    %cst_87 = arith.constant 0.000000e+00 : f32
    %155 = vector.broadcast %cst_87 : f32 to vector<8x8xf32>
    %156 = arith.cmpf ogt, %148, %155 : vector<8x8xf32>
    %cst_88 = arith.constant 1.000000e+00 : f32
    %cst_89 = arith.constant 0.000000e+00 : f32
    %157 = vector.broadcast %cst_88 : f32 to vector<8x8xf32>
    %158 = vector.broadcast %cst_89 : f32 to vector<8x8xf32>
    %159 = arith.select %156, %157, %158 : vector<8x8xi1>, vector<8x8xf32>
    %160 = arith.addf %159, %154 : vector<8x8xf32>
    %cst_90 = arith.constant dense<0.000000e+00> : vector<8xf32>
    %161 = vector.multi_reduction <add>, %160, %cst_90 [1] : vector<8x8xf32> to vector<8xf32>
    %162 = vector.shape_cast %161 : vector<8xf32> to vector<8x1xf32>
    %cst_91 = arith.constant 9.99999997E-7 : f32
    %163 = vector.broadcast %cst_91 : f32 to vector<8x1xf32>
    %164 = arith.maximumf %162, %163 : vector<8x1xf32>
    %165 = math.rsqrt %164 : vector<8x1xf32>
    %cst_92 = arith.constant dense<0.000000e+00> : vector<8xf32>
    %166 = vector.multi_reduction <add>, %160, %cst_92 [0] : vector<8x8xf32> to vector<8xf32>
    %167 = vector.shape_cast %166 : vector<8xf32> to vector<1x8xf32>
    %cst_93 = arith.constant 9.99999997E-7 : f32
    %168 = vector.broadcast %cst_93 : f32 to vector<1x8xf32>
    %169 = arith.maximumf %167, %168 : vector<1x8xf32>
    %170 = math.rsqrt %169 : vector<1x8xf32>
    %171 = vector.broadcast %165 : vector<8x1xf32> to vector<8x8xf32>
    %172 = arith.mulf %160, %171 : vector<8x8xf32>
    %173 = vector.broadcast %170 : vector<1x8xf32> to vector<8x8xf32>
    %174 = arith.mulf %172, %173 : vector<8x8xf32>
    %c2_94 = arith.constant 2 : index
    %c0_95 = arith.constant 0 : index
    %175 = vector.load %arg4[%c2_94, %c0_95] : memref<4x16xi32, #tpu.memory_space<vmem>>, vector<1x16xi32>
    %c3_96 = arith.constant 3 : index
    %c0_97 = arith.constant 0 : index
    %176 = vector.load %arg4[%c3_96, %c0_97] : memref<4x16xi32, #tpu.memory_space<vmem>>, vector<1x16xi32>
    %177 = tpu.iota {dimensions = array<i32: 0>} : vector<8x16xi32>
    %178 = vector.broadcast %175 : vector<1x16xi32> to vector<8x16xi32>
    %179 = arith.cmpi eq, %177, %178 : vector<8x16xi32>
    %cst_98 = arith.constant 1.000000e+00 : f32
    %cst_99 = arith.constant 0.000000e+00 : f32
    %180 = vector.broadcast %cst_98 : f32 to vector<8x16xf32>
    %181 = vector.broadcast %cst_99 : f32 to vector<8x16xf32>
    %182 = arith.select %179, %180, %181 : vector<8x16xi1>, vector<8x16xf32>
    %183 = vector.broadcast %176 : vector<1x16xi32> to vector<8x16xi32>
    %184 = arith.cmpi eq, %177, %183 : vector<8x16xi32>
    %cst_100 = arith.constant 1.000000e+00 : f32
    %cst_101 = arith.constant 0.000000e+00 : f32
    %185 = vector.broadcast %cst_100 : f32 to vector<8x16xf32>
    %186 = vector.broadcast %cst_101 : f32 to vector<8x16xf32>
    %187 = arith.select %184, %185, %186 : vector<8x16xi1>, vector<8x16xf32>
    %cst_102 = arith.constant dense<0.000000e+00> : vector<8x8xf32>
    %188 = tpu.matmul %182, %187, %cst_102 {dimension_numbers = #tpu.dot_dimension_numbers<[1], [1], [0], [0], [0, 0, 1, 0], [], []>} : vector<8x16xf32>, vector<8x16xf32>, vector<8x8xf32> -> vector<8x8xf32>
    %cst_103 = arith.constant dense<0.000000e+00> : vector<8x8xf32>
    %189 = tpu.matmul %187, %182, %cst_103 {dimension_numbers = #tpu.dot_dimension_numbers<[1], [1], [0], [0], [0, 0, 1, 0], [], []>} : vector<8x16xf32>, vector<8x16xf32>, vector<8x8xf32> -> vector<8x8xf32>
    %190 = arith.addf %188, %189 : vector<8x8xf32>
    %191 = tpu.iota {dimensions = array<i32: 0>} : vector<8x8xi32>
    %192 = tpu.iota {dimensions = array<i32: 1>} : vector<8x8xi32>
    %193 = arith.cmpi eq, %191, %192 : vector<8x8xi32>
    %cst_104 = arith.constant 1.000000e+00 : f32
    %cst_105 = arith.constant 0.000000e+00 : f32
    %194 = vector.broadcast %cst_104 : f32 to vector<8x8xf32>
    %195 = vector.broadcast %cst_105 : f32 to vector<8x8xf32>
    %196 = arith.select %193, %194, %195 : vector<8x8xi1>, vector<8x8xf32>
    %cst_106 = arith.constant 0.000000e+00 : f32
    %197 = vector.broadcast %cst_106 : f32 to vector<8x8xf32>
    %198 = arith.cmpf ogt, %190, %197 : vector<8x8xf32>
    %cst_107 = arith.constant 1.000000e+00 : f32
    %cst_108 = arith.constant 0.000000e+00 : f32
    %199 = vector.broadcast %cst_107 : f32 to vector<8x8xf32>
    %200 = vector.broadcast %cst_108 : f32 to vector<8x8xf32>
    %201 = arith.select %198, %199, %200 : vector<8x8xi1>, vector<8x8xf32>
    %202 = arith.addf %201, %196 : vector<8x8xf32>
    %cst_109 = arith.constant dense<0.000000e+00> : vector<8xf32>
    %203 = vector.multi_reduction <add>, %202, %cst_109 [1] : vector<8x8xf32> to vector<8xf32>
    %204 = vector.shape_cast %203 : vector<8xf32> to vector<8x1xf32>
    %cst_110 = arith.constant 9.99999997E-7 : f32
    %205 = vector.broadcast %cst_110 : f32 to vector<8x1xf32>
    %206 = arith.maximumf %204, %205 : vector<8x1xf32>
    %207 = math.rsqrt %206 : vector<8x1xf32>
    %cst_111 = arith.constant dense<0.000000e+00> : vector<8xf32>
    %208 = vector.multi_reduction <add>, %202, %cst_111 [0] : vector<8x8xf32> to vector<8xf32>
    %209 = vector.shape_cast %208 : vector<8xf32> to vector<1x8xf32>
    %cst_112 = arith.constant 9.99999997E-7 : f32
    %210 = vector.broadcast %cst_112 : f32 to vector<1x8xf32>
    %211 = arith.maximumf %209, %210 : vector<1x8xf32>
    %212 = math.rsqrt %211 : vector<1x8xf32>
    %213 = vector.broadcast %207 : vector<8x1xf32> to vector<8x8xf32>
    %214 = arith.mulf %202, %213 : vector<8x8xf32>
    %215 = vector.broadcast %212 : vector<1x8xf32> to vector<8x8xf32>
    %216 = arith.mulf %214, %215 : vector<8x8xf32>
    %c0_113 = arith.constant 0 : index
    %c0_114 = arith.constant 0 : index
    %217 = vector.load %arg3[%c0_113, %c0_114] : memref<8x16xf32, #tpu.memory_space<vmem>>, vector<8x16xf32>
    %cst_115 = arith.constant dense<0.000000e+00> : vector<8x32xf32>
    %218 = tpu.matmul %217, %125, %cst_115 {dimension_numbers = #tpu.dot_dimension_numbers<[1], [0], [0], [1], [0, 0, 1, 1], [], []>} : vector<8x16xf32>, vector<16x32xf32>, vector<8x32xf32> -> vector<8x32xf32>
    %219 = vector.broadcast %130 : vector<1x32xf32> to vector<8x32xf32>
    %220 = arith.addf %218, %219 : vector<8x32xf32>
    %cst_116 = arith.constant 0.000000e+00 : f32
    %221 = vector.broadcast %cst_116 : f32 to vector<8x32xf32>
    %222 = arith.maximumf %220, %221 : vector<8x32xf32>
    %cst_117 = arith.constant dense<0.000000e+00> : vector<8x32xf32>
    %223 = tpu.matmul %222, %126, %cst_117 {dimension_numbers = #tpu.dot_dimension_numbers<[1], [0], [0], [1], [0, 0, 1, 1], [], []>} : vector<8x32xf32>, vector<32x32xf32>, vector<8x32xf32> -> vector<8x32xf32>
    %cst_118 = arith.constant dense<0.000000e+00> : vector<8x32xf32>
    %224 = tpu.matmul %174, %223, %cst_118 {dimension_numbers = #tpu.dot_dimension_numbers<[1], [0], [0], [1], [0, 0, 1, 1], [], []>} : vector<8x8xf32>, vector<8x32xf32>, vector<8x32xf32> -> vector<8x32xf32>
    %cst_119 = arith.constant 0.000000e+00 : f32
    %225 = vector.broadcast %cst_119 : f32 to vector<8x32xf32>
    %226 = arith.maximumf %224, %225 : vector<8x32xf32>
    %cst_120 = arith.constant dense<0.000000e+00> : vector<8x32xf32>
    %227 = tpu.matmul %226, %127, %cst_120 {dimension_numbers = #tpu.dot_dimension_numbers<[1], [0], [0], [1], [0, 0, 1, 1], [], []>} : vector<8x32xf32>, vector<32x32xf32>, vector<8x32xf32> -> vector<8x32xf32>
    %cst_121 = arith.constant dense<0.000000e+00> : vector<8x32xf32>
    %228 = tpu.matmul %216, %227, %cst_121 {dimension_numbers = #tpu.dot_dimension_numbers<[1], [0], [0], [1], [0, 0, 1, 1], [], []>} : vector<8x8xf32>, vector<8x32xf32>, vector<8x32xf32> -> vector<8x32xf32>
    %cst_122 = arith.constant 0.000000e+00 : f32
    %229 = vector.broadcast %cst_122 : f32 to vector<8x32xf32>
    %230 = arith.maximumf %228, %229 : vector<8x32xf32>
    %cst_123 = arith.constant dense<0.000000e+00> : vector<8x32xf32>
    %231 = tpu.matmul %230, %128, %cst_123 {dimension_numbers = #tpu.dot_dimension_numbers<[1], [0], [0], [1], [0, 0, 1, 1], [], []>} : vector<8x32xf32>, vector<32x32xf32>, vector<8x32xf32> -> vector<8x32xf32>
    %232 = math.tanh %231 : vector<8x32xf32>
    %cst_124 = arith.constant dense<0.000000e+00> : vector<1x8xf32>
    %233 = tpu.matmul %131, %232, %cst_124 {dimension_numbers = #tpu.dot_dimension_numbers<[1], [1], [0], [0], [0, 0, 1, 0], [], []>} : vector<1x32xf32>, vector<8x32xf32>, vector<1x8xf32> -> vector<1x8xf32>
    %cst_125 = arith.constant dense<0xFF800000> : vector<1xf32>
    %234 = vector.multi_reduction <maximumf>, %233, %cst_125 [1] : vector<1x8xf32> to vector<1xf32>
    %235 = vector.shape_cast %234 : vector<1xf32> to vector<1x1xf32>
    %236 = vector.broadcast %235 : vector<1x1xf32> to vector<1x8xf32>
    %237 = arith.subf %233, %236 : vector<1x8xf32>
    %238 = math.exp %237 : vector<1x8xf32>
    %cst_126 = arith.constant dense<0.000000e+00> : vector<1xf32>
    %239 = vector.multi_reduction <add>, %238, %cst_126 [1] : vector<1x8xf32> to vector<1xf32>
    %240 = vector.shape_cast %239 : vector<1xf32> to vector<1x1xf32>
    %241 = vector.broadcast %240 : vector<1x1xf32> to vector<1x8xf32>
    %242 = arith.divf %238, %241 : vector<1x8xf32>
    %cst_127 = arith.constant dense<0.000000e+00> : vector<1x32xf32>
    %243 = tpu.matmul %242, %230, %cst_127 {dimension_numbers = #tpu.dot_dimension_numbers<[1], [0], [0], [1], [0, 0, 1, 1], [], []>} : vector<1x8xf32>, vector<8x32xf32>, vector<1x32xf32> -> vector<1x32xf32>
    %cst_128 = arith.constant dense<0.000000e+00> : vector<1x32xf32>
    %244 = tpu.matmul %243, %129, %cst_128 {dimension_numbers = #tpu.dot_dimension_numbers<[1], [0], [0], [1], [0, 0, 1, 1], [], []>} : vector<1x32xf32>, vector<32x32xf32>, vector<1x32xf32> -> vector<1x32xf32>
    %245 = arith.addf %244, %132 : vector<1x32xf32>
    %cst_129 = arith.constant 0.000000e+00 : f32
    %246 = vector.broadcast %cst_129 : f32 to vector<8x128xf32>
    %c0_130 = arith.constant 0 : index
    %c0_131 = arith.constant 0 : index
    %247 = vector.load %arg7[%c0_130, %c0_131] : memref<8x128xf32, #tpu.memory_space<vmem>>, vector<8x128xf32>
    tpu.vector_store %arg7[%c0_130, %c0_131], %246 {strides = array<i32>} : memref<8x128xf32, #tpu.memory_space<vmem>>, vector<8x128xf32>,
    %c0_132 = arith.constant 0 : index
    %c0_133 = arith.constant 0 : index
    %248 = vector.load %arg7[%c0_132, %c0_133] : memref<8x128xf32, #tpu.memory_space<vmem>>, vector<1x32xf32>
    tpu.vector_store %arg7[%c0_132, %c0_133], %245 {strides = array<i32>} : memref<8x128xf32, #tpu.memory_space<vmem>>, vector<1x32xf32>,
    %c1_134 = arith.constant 1 : index
    %c0_135 = arith.constant 0 : index
    %249 = vector.load %arg7[%c1_134, %c0_135] : memref<8x128xf32, #tpu.memory_space<vmem>>, vector<1x8xf32>
    tpu.vector_store %arg7[%c1_134, %c0_135], %242 {strides = array<i32>} : memref<8x128xf32, #tpu.memory_space<vmem>>, vector<1x8xf32>,
    return
  }
}

</mosaic_0001>

<llo_original>
// kernel: tpu_custom_call.1
$region0: #{tpu_custom_call.1}
  #allocation0 [shape = 'u32[]', space=smem, size = 0x4, offset = 0x4, fixed_abs, tag = 'smem constant byte address 0x4 - core index']
  #allocation1 [shape = 'u32[72,128]{1,0:T(1,128)}', space=vmem, size = 0x9000, scoped, tag = 'internal scratch']
  %s0 = inlined_call_operand.vmem [shape: f32[8,32], index: 0, kind: input, shape index: {}]
  %s1 = inlined_call_operand.vmem [shape: s32[4,16], index: 1, kind: input, shape index: {}]
  %s2 = inlined_call_operand.vmem [shape: f32[184,32], index: 2, kind: input, shape index: {}]
  %s3 = inlined_call_operand.vmem [shape: f32[8,16], index: 3, kind: input, shape index: {}]
  %s4 = inlined_call_operand.vmem [shape: s32[4,16], index: 4, kind: input, shape index: {}]
  %s5 = inlined_call_operand.vmem [shape: f32[168,32], index: 5, kind: input, shape index: {}]
  %s6 = inlined_call_operand.hbm [shape: f32[8,128], index: 6, kind: output, shape index: {0}]
  %s7 = inlined_call_operand.hbm [shape: f32[8,128], index: 7, kind: output, shape index: {1}]
  %8 = xla_tuple %s6, %s7
  %s9 = sld [smem:[#allocation0]]
  $region42: #{tpu_custom_call.1} parent=0
    _
  %s11 = ssub.s32 1, %s9
  %s12 = scalar_select 0, %s11, %s9
  $region1: #{tpu_custom_call.1} parent=0
    #allocation2 [shape = 'u8[4096]{0}', space=vmem, size = 0x1000, scoped, tag = 'output window, operand 0, single buffered']
    #allocation3 [shape = 's32[1]{0}', space=sflag, size = 0x4, scoped, tag = 'scoped memory for tpu_custom_call.1']
    #allocation4 [shape = 'u8[4096]{0}', space=vmem, size = 0x1000, scoped, tag = 'output window, operand 1, single buffered']
    #allocation5 [shape = 's32[1]{0}', space=sflag, size = 0x4, scoped, tag = 'scoped memory for tpu_custom_call.1']
    %13 = vsyncpa [#allocation3], 0
    %14 = vsyncpa [#allocation5], 0
    // Predicated region
    $region2: #{tpu_custom_call.1} parent=1 // pred_check
      _
    $region3: #{tpu_custom_call.1} parent=1 // pred_check_branch
      %16 = sbr.rel (0) target = $region5
    $region4: #{tpu_custom_call.1} parent=1 // pred_region
      _
    $region5: #{tpu_custom_call.1} parent=1 // pred_fallthru
      _
    // Predicated region
    $region6: #{tpu_custom_call.1} parent=1 // pred_check
      _
    $region7: #{tpu_custom_call.1} parent=1 // pred_check_branch
      %18 = sbr.rel (0) target = $region9
    $region8: #{tpu_custom_call.1} parent=1 // pred_region
      _
    $region9: #{tpu_custom_call.1} parent=1 // pred_fallthru
      _
    // Predicated region
    $region10: #{tpu_custom_call.1} parent=1 // pred_check
      _
    $region11: #{tpu_custom_call.1} parent=1 // pred_check_branch
      %20 = sbr.rel (0) target = $region13
    $region12: #{tpu_custom_call.1} parent=1 // pred_region
      _
    $region13: #{tpu_custom_call.1} parent=1 // pred_fallthru
      _
    // Predicated region
    $region14: #{tpu_custom_call.1} parent=1 // pred_check
      _
    $region15: #{tpu_custom_call.1} parent=1 // pred_check_branch
      %22 = sbr.rel (0) target = $region17
    $region16: #{tpu_custom_call.1} parent=1 // pred_region
      _
    $region17: #{tpu_custom_call.1} parent=1 // pred_fallthru
      _
    // Predicated region
    $region18: #{tpu_custom_call.1} parent=1 // pred_check
      _
    $region19: #{tpu_custom_call.1} parent=1 // pred_check_branch
      %24 = sbr.rel (0) target = $region21
    $region20: #{tpu_custom_call.1} parent=1 // pred_region
      _
    $region21: #{tpu_custom_call.1} parent=1 // pred_fallthru
      _
    // Predicated region
    $region22: #{tpu_custom_call.1} parent=1 // pred_check
      _
    $region23: #{tpu_custom_call.1} parent=1 // pred_check_branch
      %26 = sbr.rel (0) target = $region25
    $region24: #{tpu_custom_call.1} parent=1 // pred_region
      _
    $region25: #{tpu_custom_call.1} parent=1 // pred_fallthru
      _
    %v27 = vld [vmem:[%s2] sm:$0xff]
    %v28 = vld [vmem:[%s2 + $0x8] sm:$0xff]
    %v29 = vld [vmem:[%s2 + $0x10] sm:$0xff]
    %v30 = vld [vmem:[%s2 + $0x18] sm:$0xff]
    %v31 = vld [vmem:[%s2 + $0x20] sm:$0xff]
    %v32 = vld [vmem:[%s2 + $0x28] sm:$0xff]
    %v33 = vld [vmem:[%s2 + $0x30] sm:$0xff]
    %v34 = vld [vmem:[%s2 + $0x38] sm:$0xff]
    %v35 = vld [vmem:[%s2 + $0x40] sm:$0xff]
    %v36 = vld [vmem:[%s2 + $0x48] sm:$0xff]
    %v37 = vld [vmem:[%s2 + $0x50] sm:$0xff]
    %v38 = vld [vmem:[%s2 + $0x58] sm:$0xff]
    %v39 = vld [vmem:[%s2 + $0x60] sm:$0xff]
    %v40 = vld [vmem:[%s2 + $0x68] sm:$0xff]
    %v41 = vld [vmem:[%s2 + $0x70] sm:$0xff]
    %v42 = vld [vmem:[%s2 + $0x78] sm:$0xff]
    %v43 = vld [vmem:[%s2 + $0x80] sm:$0xff]
    %v44 = vld [vmem:[%s2 + $0x88] sm:$0xff]
    %v45 = vld [vmem:[%s2 + $0x90] sm:$0xff]
    %v46 = vld [vmem:[%s2 + $0x98] sm:$0xff]
    %v47 = vld [vmem:[%s2 + $0xa0] sm:$0x1]
    %v48 = vld [vmem:[%s2 + $0xa8] sm:$0x1]
    %v49 = vld [vmem:[%s2 + $0xb0] sm:$0x1]
    %v50 = vld [vmem:[%s1] sm:$0x1]
    %v51 = vld [vmem:[%s1 + $0x1] sm:$0x1]
    %v52 = vlaneseq
    %v53 = vshrl.u32 %v52, 7
    %v54 = vperm.slane %v50, 0
    %vm55 = vcmp.eq.s32.totalorder %v53, %v54
    %v56 = vsel %vm55, 1.0, 0.0
    %v57 = vperm.slane %v51, 0
    %vm58 = vcmp.eq.s32.totalorder %v53, %v57
    %v59 = vsel %vm58, 1.0, 0.0
    %vm60 = vcmask 130048
    %v62 = vsel %vm60, %v59, 0
    %v65 = vsel %vm60, %v56, 0
    %67 = vmatpush.xpose.msra.mxu0 0.0
    %68 = vmatpush.xpose.msra.mxu0 0.0
    %69 = vmatpush.xpose.msra.mxu0 0.0
    %70 = vmatpush.xpose.msra.mxu0 0.0
    %71 = vmatpush.xpose.msra.mxu0 0.0
    %72 = vmatpush.xpose.msra.mxu0 0.0
    %73 = vmatpush.xpose.msra.mxu0 0.0
    %74 = vmatpush.xpose.msra.mxu0 0.0
    %75 = vmatpush.xpose.msra.mxu0 0.0
    %76 = vmatpush.xpose.msra.mxu0 0.0
    %77 = vmatpush.xpose.msra.mxu0 0.0
    %78 = vmatpush.xpose.msra.mxu0 0.0
    %79 = vmatpush.xpose.msra.mxu0 0.0
    %80 = vmatpush.xpose.msra.mxu0 0.0
    %81 = vmatpush.xpose.msra.mxu0 0.0
    %82 = vmatpush.xpose.msra.mxu0 %v65
    %83 = vmatmul.f32.gmra.mxu0 %v62
    %v84 = vpop.f32.mrf.mxu0
    %v85 = vadd.f32 0.0, %v84
    %86 = vdwg.mxu0
    %87 = vmatpush.xpose.msra.mxu0 0.0
    %88 = vmatpush.xpose.msra.mxu0 0.0
    %89 = vmatpush.xpose.msra.mxu0 0.0
    %90 = vmatpush.xpose.msra.mxu0 0.0
    %91 = vmatpush.xpose.msra.mxu0 0.0
    %92 = vmatpush.xpose.msra.mxu0 0.0
    %93 = vmatpush.xpose.msra.mxu0 0.0
    %94 = vmatpush.xpose.msra.mxu0 0.0
    %95 = vmatpush.xpose.msra.mxu0 0.0
    %96 = vmatpush.xpose.msra.mxu0 0.0
    %97 = vmatpush.xpose.msra.mxu0 0.0
    %98 = vmatpush.xpose.msra.mxu0 0.0
    %99 = vmatpush.xpose.msra.mxu0 0.0
    %100 = vmatpush.xpose.msra.mxu0 0.0
    %101 = vmatpush.xpose.msra.mxu0 0.0
    %102 = vmatpush.xpose.msra.mxu0 %v62
    %103 = vmatmul.f32.gmra.mxu0 %v65
    %v104 = vpop.f32.mrf.mxu0
    %v105 = vadd.f32 %v85, %v104
    %106 = vdwg.mxu0
    %v107 = vlaneseq
    %v108 = vand.u32 %v107, 127
    %vm109 = vcmp.eq.s32.totalorder %v53, %v108
    %v110 = vsel %vm109, 1.0, 0.0
    %vm111 = vcmp.gt.f32.partialorder %v105, 0.0
    %v112 = vsel %vm111, 1.0, 0.0
    %v113 = vadd.f32 %v112, %v110
    %vm114 = vcmask 64512
    %v115 = vsel %vm114, %v113, 0.0
    %116 = vadd.xlane.f32.xlu0 %v115
    %v117 = vpop.xlane.xlu0 %116
    %v118 = vmax.f32 %v117, 1e-06
    %v119 = vrsqrt.pop %v118
    %v120 = vmul.f32 %v119, %v118
    %v121 = vmul.f32 %v120, %v119
    %v122 = vmul.f32 0.5, %v121
    %v123 = vsub.f32 1.5, %v122
    %v124 = vmul.f32 %v119, %v123
    %vm125 = vweird.f32 %v118
    %vm126 = vweird.f32 %v119
    %vm127 = vmor %vm125, %vm126
    %v128 = vsel %vm127, %v119, %v124
    %v129 = vrot.slane %v115, 4
    %v130 = vadd.f32 %v115, %v129
    %v131 = vrot.slane %v130, 2
    %v132 = vadd.f32 %v130, %v131
    %v133 = vrot.slane %v132, 1
    %v134 = vadd.f32 %v132, %v133
    %v135 = vmax.f32 %v134, 1e-06
    %v136 = vrsqrt.pop %v135
    %v137 = vmul.f32 %v136, %v135
    %v138 = vmul.f32 %v137, %v136
    %v139 = vmul.f32 0.5, %v138
    %v140 = vsub.f32 1.5, %v139
    %v141 = vmul.f32 %v136, %v140
    %vm142 = vweird.f32 %v135
    %vm143 = vweird.f32 %v136
    %vm144 = vmor %vm142, %vm143
    %v145 = vsel %vm144, %v136, %v141
    %v146 = vmul.f32 %v113, %v128
    %v147 = vmul.f32 %v146, %v145
    %v148 = vld [vmem:[%s1 + $0x2] sm:$0x1]
    %v149 = vld [vmem:[%s1 + $0x3] sm:$0x1]
    %v150 = vperm.slane %v148, 0
    %vm151 = vcmp.eq.s32.totalorder %v53, %v150
    %v152 = vsel %vm151, 1.0, 0.0
    %v153 = vperm.slane %v149, 0
    %vm154 = vcmp.eq.s32.totalorder %v53, %v153
    %v155 = vsel %vm154, 1.0, 0.0
    %v157 = vsel %vm60, %v155, 0
    %v160 = vsel %vm60, %v152, 0
    %162 = vmatpush.xpose.msra.mxu0 0.0
    %163 = vmatpush.xpose.msra.mxu0 0.0
    %164 = vmatpush.xpose.msra.mxu0 0.0
    %165 = vmatpush.xpose.msra.mxu0 0.0
    %166 = vmatpush.xpose.msra.mxu0 0.0
    %167 = vmatpush.xpose.msra.mxu0 0.0
    %168 = vmatpush.xpose.msra.mxu0 0.0
    %169 = vmatpush.xpose.msra.mxu0 0.0
    %170 = vmatpush.xpose.msra.mxu0 0.0
    %171 = vmatpush.xpose.msra.mxu0 0.0
    %172 = vmatpush.xpose.msra.mxu0 0.0
    %173 = vmatpush.xpose.msra.mxu0 0.0
    %174 = vmatpush.xpose.msra.mxu0 0.0
    %175 = vmatpush.xpose.msra.mxu0 0.0
    %176 = vmatpush.xpose.msra.mxu0 0.0
    %177 = vmatpush.xpose.msra.mxu0 %v160
    %178 = vmatmul.f32.gmra.mxu0 %v157
    %v179 = vpop.f32.mrf.mxu0
    %v180 = vadd.f32 0.0, %v179
    %181 = vdwg.mxu0
    %182 = vmatpush.xpose.msra.mxu0 0.0
    %183 = vmatpush.xpose.msra.mxu0 0.0
    %184 = vmatpush.xpose.msra.mxu0 0.0
    %185 = vmatpush.xpose.msra.mxu0 0.0
    %186 = vmatpush.xpose.msra.mxu0 0.0
    %187 = vmatpush.xpose.msra.mxu0 0.0
    %188 = vmatpush.xpose.msra.mxu0 0.0
    %189 = vmatpush.xpose.msra.mxu0 0.0
    %190 = vmatpush.xpose.msra.mxu0 0.0
    %191 = vmatpush.xpose.msra.mxu0 0.0
    %192 = vmatpush.xpose.msra.mxu0 0.0
    %193 = vmatpush.xpose.msra.mxu0 0.0
    %194 = vmatpush.xpose.msra.mxu0 0.0
    %195 = vmatpush.xpose.msra.mxu0 0.0
    %196 = vmatpush.xpose.msra.mxu0 0.0
    %197 = vmatpush.xpose.msra.mxu0 %v157
    %198 = vmatmul.f32.gmra.mxu0 %v160
    %v199 = vpop.f32.mrf.mxu0
    %v200 = vadd.f32 %v180, %v199
    %201 = vdwg.mxu0
    %vm202 = vcmp.gt.f32.partialorder %v200, 0.0
    %v203 = vsel %vm202, 1.0, 0.0
    %v204 = vadd.f32 %v203, %v110
    %v205 = vsel %vm114, %v204, 0.0
    %206 = vadd.xlane.f32.xlu0 %v205
    %v207 = vpop.xlane.xlu0 %206
    %v208 = vmax.f32 %v207, 1e-06
    %v209 = vrsqrt.pop %v208
    %v210 = vmul.f32 %v209, %v208
    %v211 = vmul.f32 %v210, %v209
    %v212 = vmul.f32 0.5, %v211
    %v213 = vsub.f32 1.5, %v212
    %v214 = vmul.f32 %v209, %v213
    %vm215 = vweird.f32 %v208
    %vm216 = vweird.f32 %v209
    %vm217 = vmor %vm215, %vm216
    %v218 = vsel %vm217, %v209, %v214
    %v219 = vrot.slane %v205, 4
    %v220 = vadd.f32 %v205, %v219
    %v221 = vrot.slane %v220, 2
    %v222 = vadd.f32 %v220, %v221
    %v223 = vrot.slane %v222, 1
    %v224 = vadd.f32 %v222, %v223
    %v225 = vmax.f32 %v224, 1e-06
    %v226 = vrsqrt.pop %v225
    %v227 = vmul.f32 %v226, %v225
    %v228 = vmul.f32 %v227, %v226
    %v229 = vmul.f32 0.5, %v228
    %v230 = vsub.f32 1.5, %v229
    %v231 = vmul.f32 %v226, %v230
    %vm232 = vweird.f32 %v225
    %vm233 = vweird.f32 %v226
    %vm234 = vmor %vm232, %vm233
    %v235 = vsel %vm234, %v226, %v231
    %v236 = vmul.f32 %v204, %v218
    %v237 = vmul.f32 %v236, %v235
    %v238 = vld [vmem:[%s0] sm:$0xff]
    %v239 = vperm.slane %v47, 0
    %vm240 = vcmask 261120
    %v242 = vsel %vm240, %v238, 0
    %244 = vmatpush.msra.mxu0 0.0
    %245 = vmatpush.msra.mxu0 0.0
    %246 = vmatpush.msra.mxu0 0.0
    %247 = vmatpush.msra.mxu0 0.0
    %248 = vmatpush.msra.mxu0 0.0
    %249 = vmatpush.msra.mxu0 0.0
    %250 = vmatpush.msra.mxu0 0.0
    %251 = vmatpush.msra.mxu0 0.0
    %252 = vmatpush.msra.mxu0 0.0
    %253 = vmatpush.msra.mxu0 0.0
    %254 = vmatpush.msra.mxu0 0.0
    %255 = vmatpush.msra.mxu0 0.0
    %256 = vmatpush.msra.mxu0 %v30
    %257 = vmatpush.msra.mxu0 %v29
    %258 = vmatpush.msra.mxu0 %v28
    %259 = vmatpush.msra.mxu0 %v27
    %260 = vmatmul.f32.gmra.mxu0 %v242
    %v261 = vpop.f32.mrf.mxu0
    %v262 = vadd.f32 %v239, %v261
    %263 = vdwg.mxu0
    %v264 = vmax.f32 %v262, 0.0
    %v266 = vsel %vm240, %v264, 0
    %268 = vmatpush.msra.mxu0 0.0
    %269 = vmatpush.msra.mxu0 0.0
    %270 = vmatpush.msra.mxu0 0.0
    %271 = vmatpush.msra.mxu0 0.0
    %272 = vmatpush.msra.mxu0 0.0
    %273 = vmatpush.msra.mxu0 0.0
    %274 = vmatpush.msra.mxu0 0.0
    %275 = vmatpush.msra.mxu0 0.0
    %276 = vmatpush.msra.mxu0 0.0
    %277 = vmatpush.msra.mxu0 0.0
    %278 = vmatpush.msra.mxu0 0.0
    %279 = vmatpush.msra.mxu0 0.0
    %280 = vmatpush.msra.mxu0 %v34
    %281 = vmatpush.msra.mxu0 %v33
    %282 = vmatpush.msra.mxu0 %v32
    %283 = vmatpush.msra.mxu0 %v31
    %284 = vmatmul.f32.gmra.mxu0 %v266
    %v285 = vpop.f32.mrf.mxu0
    %v286 = vadd.f32 0.0, %v285
    %287 = vdwg.mxu0
    %v289 = vsel %vm114, %v147, 0
    %291 = vmatpush.msra.mxu0 0.0
    %292 = vmatpush.msra.mxu0 0.0
    %293 = vmatpush.msra.mxu0 0.0
    %294 = vmatpush.msra.mxu0 0.0
    %295 = vmatpush.msra.mxu0 0.0
    %296 = vmatpush.msra.mxu0 0.0
    %297 = vmatpush.msra.mxu0 0.0
    %298 = vmatpush.msra.mxu0 0.0
    %299 = vmatpush.msra.mxu0 0.0
    %300 = vmatpush.msra.mxu0 0.0
    %301 = vmatpush.msra.mxu0 0.0
    %302 = vmatpush.msra.mxu0 0.0
    %303 = vmatpush.msra.mxu0 0.0
    %304 = vmatpush.msra.mxu0 0.0
    %305 = vmatpush.msra.mxu0 0.0
    %306 = vmatpush.msra.mxu0 %v286
    %307 = vmatmul.f32.gmra.mxu0 %v289
    %v308 = vpop.f32.mrf.mxu0
    %v309 = vadd.f32 0.0, %v308
    %310 = vdwg.mxu0
    %v311 = vmax.f32 %v309, 0.0
    %v313 = vsel %vm240, %v311, 0
    %315 = vmatpush.msra.mxu0 0.0
    %316 = vmatpush.msra.mxu0 0.0
    %317 = vmatpush.msra.mxu0 0.0
    %318 = vmatpush.msra.mxu0 0.0
    %319 = vmatpush.msra.mxu0 0.0
    %320 = vmatpush.msra.mxu0 0.0
    %321 = vmatpush.msra.mxu0 0.0
    %322 = vmatpush.msra.mxu0 0.0
    %323 = vmatpush.msra.mxu0 0.0
    %324 = vmatpush.msra.mxu0 0.0
    %325 = vmatpush.msra.mxu0 0.0
    %326 = vmatpush.msra.mxu0 0.0
    %327 = vmatpush.msra.mxu0 %v38
    %328 = vmatpush.msra.mxu0 %v37
    %329 = vmatpush.msra.mxu0 %v36
    %330 = vmatpush.msra.mxu0 %v35
    %331 = vmatmul.f32.gmra.mxu0 %v313
    %v332 = vpop.f32.mrf.mxu0
    %v333 = vadd.f32 0.0, %v332
    %334 = vdwg.mxu0
    %v336 = vsel %vm114, %v237, 0
    %338 = vmatpush.msra.mxu0 0.0
    %339 = vmatpush.msra.mxu0 0.0
    %340 = vmatpush.msra.mxu0 0.0
    %341 = vmatpush.msra.mxu0 0.0
    %342 = vmatpush.msra.mxu0 0.0
    %343 = vmatpush.msra.mxu0 0.0
    %344 = vmatpush.msra.mxu0 0.0
    %345 = vmatpush.msra.mxu0 0.0
    %346 = vmatpush.msra.mxu0 0.0
    %347 = vmatpush.msra.mxu0 0.0
    %348 = vmatpush.msra.mxu0 0.0
    %349 = vmatpush.msra.mxu0 0.0
    %350 = vmatpush.msra.mxu0 0.0
    %351 = vmatpush.msra.mxu0 0.0
    %352 = vmatpush.msra.mxu0 0.0
    %353 = vmatpush.msra.mxu0 %v333
    %354 = vmatmul.f32.gmra.mxu0 %v336
    %v355 = vpop.f32.mrf.mxu0
    %v356 = vadd.f32 0.0, %v355
    %357 = vdwg.mxu0
    %v358 = vmax.f32 %v356, 0.0
    %v360 = vsel %vm240, %v358, 0
    %362 = vmatpush.msra.mxu0 0.0
    %363 = vmatpush.msra.mxu0 0.0
    %364 = vmatpush.msra.mxu0 0.0
    %365 = vmatpush.msra.mxu0 0.0
    %366 = vmatpush.msra.mxu0 0.0
    %367 = vmatpush.msra.mxu0 0.0
    %368 = vmatpush.msra.mxu0 0.0
    %369 = vmatpush.msra.mxu0 0.0
    %370 = vmatpush.msra.mxu0 0.0
    %371 = vmatpush.msra.mxu0 0.0
    %372 = vmatpush.msra.mxu0 0.0
    %373 = vmatpush.msra.mxu0 0.0
    %374 = vmatpush.msra.mxu0 %v42
    %375 = vmatpush.msra.mxu0 %v41
    %376 = vmatpush.msra.mxu0 %v40
    %377 = vmatpush.msra.mxu0 %v39
    %378 = vmatmul.f32.gmra.mxu0 %v360
    %v379 = vpop.f32.mrf.mxu0
    %v380 = vadd.f32 0.0, %v379
    %381 = vdwg.mxu0
    %v382 = vtanh.pop %v380
    %v384 = vsel %vm240, %v48, 0
    %v387 = vsel %vm240, %v382, 0
    %389 = vmatpush.xpose.msra.mxu0 0.0
    %390 = vmatpush.xpose.msra.mxu0 0.0
    %391 = vmatpush.xpose.msra.mxu0 0.0
    %392 = vmatpush.xpose.msra.mxu0 0.0
    %393 = vmatpush.xpose.msra.mxu0 0.0
    %394 = vmatpush.xpose.msra.mxu0 0.0
    %395 = vmatpush.xpose.msra.mxu0 0.0
    %396 = vmatpush.xpose.msra.mxu0 0.0
    %397 = vmatpush.xpose.msra.mxu0 0.0
    %398 = vmatpush.xpose.msra.mxu0 0.0
    %399 = vmatpush.xpose.msra.mxu0 0.0
    %400 = vmatpush.xpose.msra.mxu0 0.0
    %401 = vmatpush.xpose.msra.mxu0 0.0
    %402 = vmatpush.xpose.msra.mxu0 0.0
    %403 = vmatpush.xpose.msra.mxu0 0.0
    %404 = vmatpush.xpose.msra.mxu0 %v387
    %405 = vmatmul.f32.gmra.mxu0 %v384
    %v406 = vpop.f32.mrf.mxu0
    %v407 = vadd.f32 0.0, %v406
    %408 = vdwg.mxu0
    %vm409 = vcmask 57344
    %v410 = vsel %vm409, %v407, -inf
    %411 = vmax.xlane.f32.xlu0 %v410
    %v412 = vpop.xlane.xlu0 %411
    %v413 = vsub.f32 %v407, %v412
    %v414 = vmul.f32 %v413, 1.442695
    %v415 = vpow.pop %v414
    %v416 = vsel %vm409, %v415, 0.0
    %417 = vadd.xlane.f32.xlu0 %v416
    %v418 = vpop.xlane.xlu0 %417
    %v419 = vrcp.pop %v418
    %v420 = vmul.f32 %v418, %v419
    %v421 = vsub.f32 1.0, %v420
    %v422 = vmul.f32 %v419, %v421
    %v423 = vadd.f32 %v419, %v422
    %vm424 = vweird.f32 %v418
    %vm425 = vweird.f32 %v419
    %vm426 = vmor %vm424, %vm425
    %v427 = vsel %vm426, %v419, %v423
    %v428 = vand.u32 2147483647, %v418
    %vm429 = vcmp.eq.f32.partialorder %v428, 8.507059e+37
    %v430 = vand.u32 %v418, 2147483648
    %v431 = vor.u32 1.1754944e-38, %v430
    %v432 = vsel %vm429, %v431, %v427
    %v433 = vmul.f32 %v415, %v432
    %v435 = vsel %vm114, %v433, 0
    %437 = vmatpush.msra.mxu0 0.0
    %438 = vmatpush.msra.mxu0 0.0
    %439 = vmatpush.msra.mxu0 0.0
    %440 = vmatpush.msra.mxu0 0.0
    %441 = vmatpush.msra.mxu0 0.0
    %442 = vmatpush.msra.mxu0 0.0
    %443 = vmatpush.msra.mxu0 0.0
    %444 = vmatpush.msra.mxu0 0.0
    %445 = vmatpush.msra.mxu0 0.0
    %446 = vmatpush.msra.mxu0 0.0
    %447 = vmatpush.msra.mxu0 0.0
    %448 = vmatpush.msra.mxu0 0.0
    %449 = vmatpush.msra.mxu0 0.0
    %450 = vmatpush.msra.mxu0 0.0
    %451 = vmatpush.msra.mxu0 0.0
    %452 = vmatpush.msra.mxu0 %v358
    %453 = vmatmul.f32.gmra.mxu0 %v435
    %v454 = vpop.f32.mrf.mxu0
    %v455 = vadd.f32 0.0, %v454
    %456 = vdwg.mxu0
    %v458 = vsel %vm240, %v455, 0
    %460 = vmatpush.msra.mxu0 0.0
    %461 = vmatpush.msra.mxu0 0.0
    %462 = vmatpush.msra.mxu0 0.0
    %463 = vmatpush.msra.mxu0 0.0
    %464 = vmatpush.msra.mxu0 0.0
    %465 = vmatpush.msra.mxu0 0.0
    %466 = vmatpush.msra.mxu0 0.0
    %467 = vmatpush.msra.mxu0 0.0
    %468 = vmatpush.msra.mxu0 0.0
    %469 = vmatpush.msra.mxu0 0.0
    %470 = vmatpush.msra.mxu0 0.0
    %471 = vmatpush.msra.mxu0 0.0
    %472 = vmatpush.msra.mxu0 %v46
    %473 = vmatpush.msra.mxu0 %v45
    %474 = vmatpush.msra.mxu0 %v44
    %475 = vmatpush.msra.mxu0 %v43
    %476 = vmatmul.f32.gmra.mxu0 %v458
    %v477 = vpop.f32.mrf.mxu0
    %v478 = vadd.f32 %v49, %v477
    %479 = vdwg.mxu0
    %480 = vst [vmem:[#allocation2] sm:$0xff] 0.0
    %vm481 = vcmask 253952
    %482 = vst.msk [vmem:[#allocation2] sm:$0x1] %vm481, %v478
    %483 = vst.msk [vmem:[#allocation2 + $0x1] sm:$0x1] %vm409, %v433
    %v484 = vld [vmem:[%s5] sm:$0xff]
    %v485 = vld [vmem:[%s5 + $0x8] sm:$0xff]
    %v486 = vld [vmem:[%s5 + $0x10] sm:$0xff]
    %v487 = vld [vmem:[%s5 + $0x18] sm:$0xff]
    %v488 = vld [vmem:[%s5 + $0x20] sm:$0xff]
    %v489 = vld [vmem:[%s5 + $0x28] sm:$0xff]
    %v490 = vld [vmem:[%s5 + $0x30] sm:$0xff]
    %v491 = vld [vmem:[%s5 + $0x38] sm:$0xff]
    %v492 = vld [vmem:[%s5 + $0x40] sm:$0xff]
    %v493 = vld [vmem:[%s5 + $0x48] sm:$0xff]
    %v494 = vld [vmem:[%s5 + $0x50] sm:$0xff]
    %v495 = vld [vmem:[%s5 + $0x58] sm:$0xff]
    %v496 = vld [vmem:[%s5 + $0x60] sm:$0xff]
    %v497 = vld [vmem:[%s5 + $0x68] sm:$0xff]
    %v498 = vld [vmem:[%s5 + $0x70] sm:$0xff]
    %v499 = vld [vmem:[%s5 + $0x78] sm:$0xff]
    %v500 = vld [vmem:[%s5 + $0x80] sm:$0xff]
    %v501 = vld [vmem:[%s5 + $0x88] sm:$0xff]
    %v502 = vld [vmem:[%s5 + $0x90] sm:$0x1]
    %v503 = vld [vmem:[%s5 + $0x98] sm:$0x1]
    %v504 = vld [vmem:[%s5 + $0xa0] sm:$0x1]
    %v505 = vld [vmem:[%s4] sm:$0x1]
    %v506 = vld [vmem:[%s4 + $0x1] sm:$0x1]
    %v507 = vperm.slane %v505, 0
    %vm508 = vcmp.eq.s32.totalorder %v53, %v507
    %v509 = vsel %vm508, 1.0, 0.0
    %v510 = vperm.slane %v506, 0
    %vm511 = vcmp.eq.s32.totalorder %v53, %v510
    %v512 = vsel %vm511, 1.0, 0.0
    %v514 = vsel %vm60, %v512, 0
    %v517 = vsel %vm60, %v509, 0
    %519 = vmatpush.xpose.msra.mxu0 0.0
    %520 = vmatpush.xpose.msra.mxu0 0.0
    %521 = vmatpush.xpose.msra.mxu0 0.0
    %522 = vmatpush.xpose.msra.mxu0 0.0
    %523 = vmatpush.xpose.msra.mxu0 0.0
    %524 = vmatpush.xpose.msra.mxu0 0.0
    %525 = vmatpush.xpose.msra.mxu0 0.0
    %526 = vmatpush.xpose.msra.mxu0 0.0
    %527 = vmatpush.xpose.msra.mxu0 0.0
    %528 = vmatpush.xpose.msra.mxu0 0.0
    %529 = vmatpush.xpose.msra.mxu0 0.0
    %530 = vmatpush.xpose.msra.mxu0 0.0
    %531 = vmatpush.xpose.msra.mxu0 0.0
    %532 = vmatpush.xpose.msra.mxu0 0.0
    %533 = vmatpush.xpose.msra.mxu0 0.0
    %534 = vmatpush.xpose.msra.mxu0 %v517
    %535 = vmatmul.f32.gmra.mxu0 %v514
    %v536 = vpop.f32.mrf.mxu0
    %v537 = vadd.f32 0.0, %v536
    %538 = vdwg.mxu0
    %539 = vmatpush.xpose.msra.mxu0 0.0
    %540 = vmatpush.xpose.msra.mxu0 0.0
    %541 = vmatpush.xpose.msra.mxu0 0.0
    %542 = vmatpush.xpose.msra.mxu0 0.0
    %543 = vmatpush.xpose.msra.mxu0 0.0
    %544 = vmatpush.xpose.msra.mxu0 0.0
    %545 = vmatpush.xpose.msra.mxu0 0.0
    %546 = vmatpush.xpose.msra.mxu0 0.0
    %547 = vmatpush.xpose.msra.mxu0 0.0
    %548 = vmatpush.xpose.msra.mxu0 0.0
    %549 = vmatpush.xpose.msra.mxu0 0.0
    %550 = vmatpush.xpose.msra.mxu0 0.0
    %551 = vmatpush.xpose.msra.mxu0 0.0
    %552 = vmatpush.xpose.msra.mxu0 0.0
    %553 = vmatpush.xpose.msra.mxu0 0.0
    %554 = vmatpush.xpose.msra.mxu0 %v514
    %555 = vmatmul.f32.gmra.mxu0 %v517
    %v556 = vpop.f32.mrf.mxu0
    %v557 = vadd.f32 %v537, %v556
    %558 = vdwg.mxu0
    %vm559 = vcmp.gt.f32.partialorder %v557, 0.0
    %v560 = vsel %vm559, 1.0, 0.0
    %v561 = vadd.f32 %v560, %v110
    %v562 = vsel %vm114, %v561, 0.0
    %563 = vadd.xlane.f32.xlu0 %v562
    %v564 = vpop.xlane.xlu0 %563
    %v565 = vmax.f32 %v564, 1e-06
    %v566 = vrsqrt.pop %v565
    %v567 = vmul.f32 %v566, %v565
    %v568 = vmul.f32 %v567, %v566
    %v569 = vmul.f32 0.5, %v568
    %v570 = vsub.f32 1.5, %v569
    %v571 = vmul.f32 %v566, %v570
    %vm572 = vweird.f32 %v565
    %vm573 = vweird.f32 %v566
    %vm574 = vmor %vm572, %vm573
    %v575 = vsel %vm574, %v566, %v571
    %v576 = vrot.slane %v562, 4
    %v577 = vadd.f32 %v562, %v576
    %v578 = vrot.slane %v577, 2
    %v579 = vadd.f32 %v577, %v578
    %v580 = vrot.slane %v579, 1
    %v581 = vadd.f32 %v579, %v580
    %v582 = vmax.f32 %v581, 1e-06
    %v583 = vrsqrt.pop %v582
    %v584 = vmul.f32 %v583, %v582
    %v585 = vmul.f32 %v584, %v583
    %v586 = vmul.f32 0.5, %v585
    %v587 = vsub.f32 1.5, %v586
    %v588 = vmul.f32 %v583, %v587
    %vm589 = vweird.f32 %v582
    %vm590 = vweird.f32 %v583
    %vm591 = vmor %vm589, %vm590
    %v592 = vsel %vm591, %v583, %v588
    %v593 = vmul.f32 %v561, %v575
    %v594 = vmul.f32 %v593, %v592
    %v595 = vld [vmem:[%s4 + $0x2] sm:$0x1]
    %v596 = vld [vmem:[%s4 + $0x3] sm:$0x1]
    %v597 = vperm.slane %v595, 0
    %vm598 = vcmp.eq.s32.totalorder %v53, %v597
    %v599 = vsel %vm598, 1.0, 0.0
    %v600 = vperm.slane %v596, 0
    %vm601 = vcmp.eq.s32.totalorder %v53, %v600
    %v602 = vsel %vm601, 1.0, 0.0
    %v604 = vsel %vm60, %v602, 0
    %v607 = vsel %vm60, %v599, 0
    %609 = vmatpush.xpose.msra.mxu0 0.0
    %610 = vmatpush.xpose.msra.mxu0 0.0
    %611 = vmatpush.xpose.msra.mxu0 0.0
    %612 = vmatpush.xpose.msra.mxu0 0.0
    %613 = vmatpush.xpose.msra.mxu0 0.0
    %614 = vmatpush.xpose.msra.mxu0 0.0
    %615 = vmatpush.xpose.msra.mxu0 0.0
    %616 = vmatpush.xpose.msra.mxu0 0.0
    %617 = vmatpush.xpose.msra.mxu0 0.0
    %618 = vmatpush.xpose.msra.mxu0 0.0
    %619 = vmatpush.xpose.msra.mxu0 0.0
    %620 = vmatpush.xpose.msra.mxu0 0.0
    %621 = vmatpush.xpose.msra.mxu0 0.0
    %622 = vmatpush.xpose.msra.mxu0 0.0
    %623 = vmatpush.xpose.msra.mxu0 0.0
    %624 = vmatpush.xpose.msra.mxu0 %v607
    %625 = vmatmul.f32.gmra.mxu0 %v604
    %v626 = vpop.f32.mrf.mxu0
    %v627 = vadd.f32 0.0, %v626
    %628 = vdwg.mxu0
    %629 = vmatpush.xpose.msra.mxu0 0.0
    %630 = vmatpush.xpose.msra.mxu0 0.0
    %631 = vmatpush.xpose.msra.mxu0 0.0
    %632 = vmatpush.xpose.msra.mxu0 0.0
    %633 = vmatpush.xpose.msra.mxu0 0.0
    %634 = vmatpush.xpose.msra.mxu0 0.0
    %635 = vmatpush.xpose.msra.mxu0 0.0
    %636 = vmatpush.xpose.msra.mxu0 0.0
    %637 = vmatpush.xpose.msra.mxu0 0.0
    %638 = vmatpush.xpose.msra.mxu0 0.0
    %639 = vmatpush.xpose.msra.mxu0 0.0
    %640 = vmatpush.xpose.msra.mxu0 0.0
    %641 = vmatpush.xpose.msra.mxu0 0.0
    %642 = vmatpush.xpose.msra.mxu0 0.0
    %643 = vmatpush.xpose.msra.mxu0 0.0
    %644 = vmatpush.xpose.msra.mxu0 %v604
    %645 = vmatmul.f32.gmra.mxu0 %v607
    %v646 = vpop.f32.mrf.mxu0
    %v647 = vadd.f32 %v627, %v646
    %648 = vdwg.mxu0
    %vm649 = vcmp.gt.f32.partialorder %v647, 0.0
    %v650 = vsel %vm649, 1.0, 0.0
    %v651 = vadd.f32 %v650, %v110
    %v652 = vsel %vm114, %v651, 0.0
    %653 = vadd.xlane.f32.xlu0 %v652
    %v654 = vpop.xlane.xlu0 %653
    %v655 = vmax.f32 %v654, 1e-06
    %v656 = vrsqrt.pop %v655
    %v657 = vmul.f32 %v656, %v655
    %v658 = vmul.f32 %v657, %v656
    %v659 = vmul.f32 0.5, %v658
    %v660 = vsub.f32 1.5, %v659
    %v661 = vmul.f32 %v656, %v660
    %vm662 = vweird.f32 %v655
    %vm663 = vweird.f32 %v656
    %vm664 = vmor %vm662, %vm663
    %v665 = vsel %vm664, %v656, %v661
    %v666 = vrot.slane %v652, 4
    %v667 = vadd.f32 %v652, %v666
    %v668 = vrot.slane %v667, 2
    %v669 = vadd.f32 %v667, %v668
    %v670 = vrot.slane %v669, 1
    %v671 = vadd.f32 %v669, %v670
    %v672 = vmax.f32 %v671, 1e-06
    %v673 = vrsqrt.pop %v672
    %v674 = vmul.f32 %v673, %v672
    %v675 = vmul.f32 %v674, %v673
    %v676 = vmul.f32 0.5, %v675
    %v677 = vsub.f32 1.5, %v676
    %v678 = vmul.f32 %v673, %v677
    %vm679 = vweird.f32 %v672
    %vm680 = vweird.f32 %v673
    %vm681 = vmor %vm679, %vm680
    %v682 = vsel %vm681, %v673, %v678
    %v683 = vmul.f32 %v651, %v665
    %v684 = vmul.f32 %v683, %v682
    %v685 = vld [vmem:[%s3] sm:$0xff]
    %v686 = vperm.slane %v502, 0
    %v688 = vsel %vm60, %v685, 0
    %690 = vmatpush.msra.mxu0 0.0
    %691 = vmatpush.msra.mxu0 0.0
    %692 = vmatpush.msra.mxu0 0.0
    %693 = vmatpush.msra.mxu0 0.0
    %694 = vmatpush.msra.mxu0 0.0
    %695 = vmatpush.msra.mxu0 0.0
    %696 = vmatpush.msra.mxu0 0.0
    %697 = vmatpush.msra.mxu0 0.0
    %698 = vmatpush.msra.mxu0 0.0
    %699 = vmatpush.msra.mxu0 0.0
    %700 = vmatpush.msra.mxu0 0.0
    %701 = vmatpush.msra.mxu0 0.0
    %702 = vmatpush.msra.mxu0 0.0
    %703 = vmatpush.msra.mxu0 0.0
    %704 = vmatpush.msra.mxu0 %v485
    %705 = vmatpush.msra.mxu0 %v484
    %706 = vmatmul.f32.gmra.mxu0 %v688
    %v707 = vpop.f32.mrf.mxu0
    %v708 = vadd.f32 %v686, %v707
    %709 = vdwg.mxu0
    %v710 = vmax.f32 %v708, 0.0
    %v712 = vsel %vm240, %v710, 0
    %714 = vmatpush.msra.mxu0 0.0
    %715 = vmatpush.msra.mxu0 0.0
    %716 = vmatpush.msra.mxu0 0.0
    %717 = vmatpush.msra.mxu0 0.0
    %718 = vmatpush.msra.mxu0 0.0
    %719 = vmatpush.msra.mxu0 0.0
    %720 = vmatpush.msra.mxu0 0.0
    %721 = vmatpush.msra.mxu0 0.0
    %722 = vmatpush.msra.mxu0 0.0
    %723 = vmatpush.msra.mxu0 0.0
    %724 = vmatpush.msra.mxu0 0.0
    %725 = vmatpush.msra.mxu0 0.0
    %726 = vmatpush.msra.mxu0 %v489
    %727 = vmatpush.msra.mxu0 %v488
    %728 = vmatpush.msra.mxu0 %v487
    %729 = vmatpush.msra.mxu0 %v486
    %730 = vmatmul.f32.gmra.mxu0 %v712
    %v731 = vpop.f32.mrf.mxu0
    %v732 = vadd.f32 0.0, %v731
    %733 = vdwg.mxu0
    %v735 = vsel %vm114, %v594, 0
    %737 = vmatpush.msra.mxu0 0.0
    %738 = vmatpush.msra.mxu0 0.0
    %739 = vmatpush.msra.mxu0 0.0
    %740 = vmatpush.msra.mxu0 0.0
    %741 = vmatpush.msra.mxu0 0.0
    %742 = vmatpush.msra.mxu0 0.0
    %743 = vmatpush.msra.mxu0 0.0
    %744 = vmatpush.msra.mxu0 0.0
    %745 = vmatpush.msra.mxu0 0.0
    %746 = vmatpush.msra.mxu0 0.0
    %747 = vmatpush.msra.mxu0 0.0
    %748 = vmatpush.msra.mxu0 0.0
    %749 = vmatpush.msra.mxu0 0.0
    %750 = vmatpush.msra.mxu0 0.0
    %751 = vmatpush.msra.mxu0 0.0
    %752 = vmatpush.msra.mxu0 %v732
    %753 = vmatmul.f32.gmra.mxu0 %v735
    %v754 = vpop.f32.mrf.mxu0
    %v755 = vadd.f32 0.0, %v754
    %756 = vdwg.mxu0
    %v757 = vmax.f32 %v755, 0.0
    %v759 = vsel %vm240, %v757, 0
    %761 = vmatpush.msra.mxu0 0.0
    %762 = vmatpush.msra.mxu0 0.0
    %763 = vmatpush.msra.mxu0 0.0
    %764 = vmatpush.msra.mxu0 0.0
    %765 = vmatpush.msra.mxu0 0.0
    %766 = vmatpush.msra.mxu0 0.0
    %767 = vmatpush.msra.mxu0 0.0
    %768 = vmatpush.msra.mxu0 0.0
    %769 = vmatpush.msra.mxu0 0.0
    %770 = vmatpush.msra.mxu0 0.0
    %771 = vmatpush.msra.mxu0 0.0
    %772 = vmatpush.msra.mxu0 0.0
    %773 = vmatpush.msra.mxu0 %v493
    %774 = vmatpush.msra.mxu0 %v492
    %775 = vmatpush.msra.mxu0 %v491
    %776 = vmatpush.msra.mxu0 %v490
    %777 = vmatmul.f32.gmra.mxu0 %v759
    %v778 = vpop.f32.mrf.mxu0
    %v779 = vadd.f32 0.0, %v778
    %780 = vdwg.mxu0
    %v782 = vsel %vm114, %v684, 0
    %784 = vmatpush.msra.mxu0 0.0
    %785 = vmatpush.msra.mxu0 0.0
    %786 = vmatpush.msra.mxu0 0.0
    %787 = vmatpush.msra.mxu0 0.0
    %788 = vmatpush.msra.mxu0 0.0
    %789 = vmatpush.msra.mxu0 0.0
    %790 = vmatpush.msra.mxu0 0.0
    %791 = vmatpush.msra.mxu0 0.0
    %792 = vmatpush.msra.mxu0 0.0
    %793 = vmatpush.msra.mxu0 0.0
    %794 = vmatpush.msra.mxu0 0.0
    %795 = vmatpush.msra.mxu0 0.0
    %796 = vmatpush.msra.mxu0 0.0
    %797 = vmatpush.msra.mxu0 0.0
    %798 = vmatpush.msra.mxu0 0.0
    %799 = vmatpush.msra.mxu0 %v779
    %800 = vmatmul.f32.gmra.mxu0 %v782
    %v801 = vpop.f32.mrf.mxu0
    %v802 = vadd.f32 0.0, %v801
    %803 = vdwg.mxu0
    %v804 = vmax.f32 %v802, 0.0
    %v806 = vsel %vm240, %v804, 0
    %808 = vmatpush.msra.mxu0 0.0
    %809 = vmatpush.msra.mxu0 0.0
    %810 = vmatpush.msra.mxu0 0.0
    %811 = vmatpush.msra.mxu0 0.0
    %812 = vmatpush.msra.mxu0 0.0
    %813 = vmatpush.msra.mxu0 0.0
    %814 = vmatpush.msra.mxu0 0.0
    %815 = vmatpush.msra.mxu0 0.0
    %816 = vmatpush.msra.mxu0 0.0
    %817 = vmatpush.msra.mxu0 0.0
    %818 = vmatpush.msra.mxu0 0.0
    %819 = vmatpush.msra.mxu0 0.0
    %820 = vmatpush.msra.mxu0 %v497
    %821 = vmatpush.msra.mxu0 %v496
    %822 = vmatpush.msra.mxu0 %v495
    %823 = vmatpush.msra.mxu0 %v494
    %824 = vmatmul.f32.gmra.mxu0 %v806
    %v825 = vpop.f32.mrf.mxu0
    %v826 = vadd.f32 0.0, %v825
    %827 = vdwg.mxu0
    %v828 = vtanh.pop %v826
    %v830 = vsel %vm240, %v503, 0
    %v833 = vsel %vm240, %v828, 0
    %835 = vmatpush.xpose.msra.mxu0 0.0
    %836 = vmatpush.xpose.msra.mxu0 0.0
    %837 = vmatpush.xpose.msra.mxu0 0.0
    %838 = vmatpush.xpose.msra.mxu0 0.0
    %839 = vmatpush.xpose.msra.mxu0 0.0
    %840 = vmatpush.xpose.msra.mxu0 0.0
    %841 = vmatpush.xpose.msra.mxu0 0.0
    %842 = vmatpush.xpose.msra.mxu0 0.0
    %843 = vmatpush.xpose.msra.mxu0 0.0
    %844 = vmatpush.xpose.msra.mxu0 0.0
    %845 = vmatpush.xpose.msra.mxu0 0.0
    %846 = vmatpush.xpose.msra.mxu0 0.0
    %847 = vmatpush.xpose.msra.mxu0 0.0
    %848 = vmatpush.xpose.msra.mxu0 0.0
    %849 = vmatpush.xpose.msra.mxu0 0.0
    %850 = vmatpush.xpose.msra.mxu0 %v833
    %851 = vmatmul.f32.gmra.mxu0 %v830
    %v852 = vpop.f32.mrf.mxu0
    %v853 = vadd.f32 0.0, %v852
    %854 = vdwg.mxu0
    %v855 = vsel %vm409, %v853, -inf
    %856 = vmax.xlane.f32.xlu0 %v855
    %v857 = vpop.xlane.xlu0 %856
    %v858 = vsub.f32 %v853, %v857
    %v859 = vmul.f32 %v858, 1.442695
    %v860 = vpow.pop %v859
    %v861 = vsel %vm409, %v860, 0.0
    %862 = vadd.xlane.f32.xlu0 %v861
    %v863 = vpop.xlane.xlu0 %862
    %v864 = vrcp.pop %v863
    %v865 = vmul.f32 %v863, %v864
    %v866 = vsub.f32 1.0, %v865
    %v867 = vmul.f32 %v864, %v866
    %v868 = vadd.f32 %v864, %v867
    %vm869 = vweird.f32 %v863
    %vm870 = vweird.f32 %v864
    %vm871 = vmor %vm869, %vm870
    %v872 = vsel %vm871, %v864, %v868
    %v873 = vand.u32 2147483647, %v863
    %vm874 = vcmp.eq.f32.partialorder %v873, 8.507059e+37
    %v875 = vand.u32 %v863, 2147483648
    %v876 = vor.u32 1.1754944e-38, %v875
    %v877 = vsel %vm874, %v876, %v872
    %v878 = vmul.f32 %v860, %v877
    %v880 = vsel %vm114, %v878, 0
    %882 = vmatpush.msra.mxu0 0.0
    %883 = vmatpush.msra.mxu0 0.0
    %884 = vmatpush.msra.mxu0 0.0
    %885 = vmatpush.msra.mxu0 0.0
    %886 = vmatpush.msra.mxu0 0.0
    %887 = vmatpush.msra.mxu0 0.0
    %888 = vmatpush.msra.mxu0 0.0
    %889 = vmatpush.msra.mxu0 0.0
    %890 = vmatpush.msra.mxu0 0.0
    %891 = vmatpush.msra.mxu0 0.0
    %892 = vmatpush.msra.mxu0 0.0
    %893 = vmatpush.msra.mxu0 0.0
    %894 = vmatpush.msra.mxu0 0.0
    %895 = vmatpush.msra.mxu0 0.0
    %896 = vmatpush.msra.mxu0 0.0
    %897 = vmatpush.msra.mxu0 %v804
    %898 = vmatmul.f32.gmra.mxu0 %v880
    %v899 = vpop.f32.mrf.mxu0
    %v900 = vadd.f32 0.0, %v899
    %901 = vdwg.mxu0
    %v903 = vsel %vm240, %v900, 0
    %905 = vmatpush.msra.mxu0 0.0
    %906 = vmatpush.msra.mxu0 0.0
    %907 = vmatpush.msra.mxu0 0.0
    %908 = vmatpush.msra.mxu0 0.0
    %909 = vmatpush.msra.mxu0 0.0
    %910 = vmatpush.msra.mxu0 0.0
    %911 = vmatpush.msra.mxu0 0.0
    %912 = vmatpush.msra.mxu0 0.0
    %913 = vmatpush.msra.mxu0 0.0
    %914 = vmatpush.msra.mxu0 0.0
    %915 = vmatpush.msra.mxu0 0.0
    %916 = vmatpush.msra.mxu0 0.0
    %917 = vmatpush.msra.mxu0 %v501
    %918 = vmatpush.msra.mxu0 %v500
    %919 = vmatpush.msra.mxu0 %v499
    %920 = vmatpush.msra.mxu0 %v498
    %921 = vmatmul.f32.gmra.mxu0 %v903
    %v922 = vpop.f32.mrf.mxu0
    %v923 = vadd.f32 %v504, %v922
    %924 = vdwg.mxu0
    %925 = vst [vmem:[#allocation4] sm:$0xff] 0.0
    %926 = vst.msk [vmem:[#allocation4] sm:$0x1] %vm481, %v923
    %927 = vst.msk [vmem:[#allocation4 + $0x1] sm:$0x1] %vm409, %v878
    // Predicated region
    $region26: #{tpu_custom_call.1} parent=1 // pred_check
      _
    $region27: #{tpu_custom_call.1} parent=1 // pred_check_branch
      %929 = sbr.rel (0) target = $region29
    $region28: #{tpu_custom_call.1} parent=1 // pred_region
      %931 = vsyncadd [#allocation3], 0
      %s933 = sshll.u32 [#allocation2], 4
      %s934 = int_to_ptr.vmem [resolvable:$true] %s933
      %s935 = sshll.u32 %s6, 4
      %s936 = int_to_ptr.hbm [resolvable:$true] %s935
      %938 = dma.vmem_to_hbm [thread:$0]  %s934, 128, %s936, [#allocation3]
    $region29: #{tpu_custom_call.1} parent=1 // pred_fallthru
      _
    // Predicated region
    $region30: #{tpu_custom_call.1} parent=1 // pred_check
      _
    $region31: #{tpu_custom_call.1} parent=1 // pred_check_branch
      %940 = sbr.rel (0) target = $region33
    $region32: #{tpu_custom_call.1} parent=1 // pred_region
      %942 = vsyncadd [#allocation5], 0
      %s944 = sshll.u32 [#allocation4], 4
      %s945 = int_to_ptr.vmem [resolvable:$true] %s944
      %s946 = sshll.u32 %s7, 4
      %s947 = int_to_ptr.hbm [resolvable:$true] %s946
      %949 = dma.vmem_to_hbm [thread:$0]  %s945, 128, %s947, [#allocation5]
    $region33: #{tpu_custom_call.1} parent=1 // pred_fallthru
      _
    // Predicated region
    $region34: #{tpu_custom_call.1} parent=1 // pred_check
      _
    $region35: #{tpu_custom_call.1} parent=1 // pred_check_branch
      %951 = sbr.rel (0) target = $region37
    $region36: #{tpu_custom_call.1} parent=1 // pred_region
      %953 = dma.done [#allocation3], 128
    $region37: #{tpu_custom_call.1} parent=1 // pred_fallthru
      _
    // Predicated region
    $region38: #{tpu_custom_call.1} parent=1 // pred_check
      _
    $region39: #{tpu_custom_call.1} parent=1 // pred_check_branch
      %955 = sbr.rel (0) target = $region41
    $region40: #{tpu_custom_call.1} parent=1 // pred_region
      %957 = dma.done [#allocation5], 128
    $region41: #{tpu_custom_call.1} parent=1 // pred_fallthru
      _
    %958 = vsyncpa [#allocation3], 1
    %959 = vsyncpa [#allocation5], 1

</llo_original>
